<compile_context>
chip_gen: v6e
topology: v6e:2x2x1
jax: 0.10.0
libtpu: 0.0.40
codegen_flags: <defaults>
</compile_context>

<pallas_src>
import functools
import math

import jax
import jax.numpy as jnp
from jax.experimental import pallas as pl
from jax.experimental.pallas import tpu as pltpu


# ----------------------------------------------------------------------------
# Pallas kernel: one (row_block, lane_tile) tile of the elementwise map.
# ----------------------------------------------------------------------------
def _sinvol_kernel(params_ref, x_ref, o_ref, *, lane_tile):
    # params_ref: SMEM (2,) f32 -> [omega = 2*pi*frequency/sr, amplitude]
    omega = params_ref[0]
    amp = params_ref[1]

    j = pl.program_id(1)                                  # time-axis block idx
    base = (j * lane_tile).astype(jnp.float32)            # absolute sample base

    # One lane-dense row of the modulation wave; broadcast across sublanes.
    # TODO(synk): for clips with > 2^24 samples the f32 sample index / sin
    # range reduction loses precision vs. a float64 reference (matches the
    # float32 torch forward for normal-length audio).
    n = x_ref.shape[-1]
    col = jax.lax.broadcasted_iota(jnp.int32, (1, n), 1).astype(jnp.float32)
    sine = jnp.sin((base + col) * omega) * amp            # (1, lane_tile)

    y = jnp.clip(x_ref[...].astype(jnp.float32) * sine, -1.0, 1.0)
    o_ref[...] = y.astype(o_ref.dtype)


# ----------------------------------------------------------------------------
# Tile selection: lane-dense, ~4 MiB blocks, >= 2 column grid steps when we can.
# ----------------------------------------------------------------------------
def _choose_tiles(B, L):
    # Rows: full batch when small (block dim == full array dim is always legal),
    # otherwise a multiple of 8; ragged last row block is fine.
    row_block = B if B <= 512 else 512
    # Lanes: full length for tiny clips, else a multiple of 128 sized so one
    # f32 block is ~4 MiB, capped so the column grid has >= 2 parallel steps.
    if L <= 256:
        return row_block, L
    budget = max(128, ((1 << 20) // row_block) // 128 * 128)   # ~4 MiB f32
    half = max(128, (L // 2) // 128 * 128)                     # >= 2 col steps
    return row_block, min(budget, half, 1 << 14)


# ----------------------------------------------------------------------------
# Wrapper: layout plumbing + pallas_call (no pads, no extra HBM passes).
# ----------------------------------------------------------------------------
def sin_vol_apply(audio, frequency, amplitude, *, sr=16000):
    """audio: (..., L) -> same shape; out = clamp(audio * amp*sin(2*pi*f*t), -1, 1)."""
    shape = audio.shape
    x = audio.reshape(-1, shape[-1])
    B, L = x.shape

    row_block, lane_tile = _choose_tiles(B, L)
    grid = (pl.cdiv(B, row_block), pl.cdiv(L, lane_tile))

    omega = (2.0 * math.pi / float(sr)) * jnp.asarray(frequency, jnp.float32)
    params = jnp.stack([omega, jnp.asarray(amplitude, jnp.float32)])

    out = pl.pallas_call(
        functools.partial(_sinvol_kernel, lane_tile=lane_tile),
        out_shape=jax.ShapeDtypeStruct((B, L), x.dtype),
        grid=grid,
        in_specs=[
            pl.BlockSpec(memory_space=pltpu.MemorySpace.SMEM),        # params
            pl.BlockSpec((row_block, lane_tile), lambda i, j: (i, j)),  # audio
        ],
        out_specs=pl.BlockSpec((row_block, lane_tile), lambda i, j: (i, j)),
        compiler_params=pltpu.CompilerParams(
            dimension_semantics=("parallel", "parallel"),   # megacore sharding
            vmem_limit_bytes=32 << 20),                     # headroom on v5e
    )(params, x)

    return out.reshape(shape)


def sin_vol_forward(audio, key, *, sr=16000):
    """Forward pass of SinVol: sample frequency/amplitude, modulate, clamp."""
    # TODO(synk): the torch module draws with torch.rand; RNG is replicated
    # host-side with jax.random (distributions match: U[0.1,0.5), U[0.5,1.5)).
    k_f, k_a = jax.random.split(key)
    frequency = jax.random.uniform(k_f, (), jnp.float32) * 0.4 + 0.1
    amplitude = jax.random.uniform(k_a, (), jnp.float32) * 1.0 + 0.5
    return sin_vol_apply(audio, frequency, amplitude, sr=sr), frequency, amplitude


if __name__ == "__main__":
    sr = 16000
    key = jax.random.PRNGKey(0)
    k_audio, k_rng = jax.random.split(key)

    # Small demo shape consistent with the module: 2 waveforms, 4000 samples.
    audio = jax.random.uniform(k_audio, (2, 4000), jnp.float32, -1.0, 1.0)

    out, frequency, amplitude = sin_vol_forward(audio, k_rng, sr=sr)
    out = jax.block_until_ready(out)

    # Pure-JAX reference (mirrors the PyTorch forward exactly).
    t = jnp.arange(audio.shape[-1], dtype=jnp.float32) / sr
    sine = jnp.sin(2.0 * math.pi * frequency * t) * amplitude
    ref = jnp.clip(audio * sine, -1.0, 1.0)

    assert out.shape == audio.shape
    assert out.dtype == audio.dtype
    assert bool(jnp.all(jnp.isfinite(out)))
    assert bool(jnp.allclose(out, ref, atol=1e-5, rtol=1e-5))
    print("KERNEL_OK")
</pallas_src>

<mosaic_0001>
module attributes {stable_mosaic.version = 11 : i64} {
  func.func @_sinvol_kernel(%arg0: i32, %arg1: i32, %arg2: memref<2xf32, #tpu.memory_space<smem>>, %arg3: memref<2x1920xf32, #tpu.memory_space<vmem>>, %arg4: memref<2x1920xf32, #tpu.memory_space<vmem>>) attributes {dimension_semantics = [#tpu.dimension_semantics<parallel>, #tpu.dimension_semantics<parallel>], iteration_bounds = array<i64: 1, 3>, scalar_prefetch = 0 : i64, scratch_operands = 0 : i64, tpu.core_type = #tpu.core_type<tc>, window_params = [{transform_indices = @transform_0, window_bounds = array<i64: 2>}, {transform_indices = @transform_1, window_bounds = array<i64: 2, 1920>}, {transform_indices = @transform_2, window_bounds = array<i64: 2, 1920>}]} {
    %c0 = arith.constant 0 : index
    %0 = memref.load %arg2[%c0] : memref<2xf32, #tpu.memory_space<smem>>
    %c1 = arith.constant 1 : index
    %1 = memref.load %arg2[%c1] : memref<2xf32, #tpu.memory_space<smem>>
    %c1920_i32 = arith.constant 1920 : i32
    %2 = arith.muli %arg1, %c1920_i32 : i32
    %3 = arith.sitofp %2 : i32 to f32
    %4 = tpu.iota {dimensions = array<i32: 1>} : vector<1x1920xi32>
    %5 = arith.sitofp %4 : vector<1x1920xi32> to vector<1x1920xf32>
    %6 = vector.broadcast %3 : f32 to vector<1x1920xf32>
    %7 = arith.addf %6, %5 : vector<1x1920xf32>
    %8 = vector.broadcast %0 : f32 to vector<1x1920xf32>
    %9 = arith.mulf %7, %8 : vector<1x1920xf32>
    %10 = math.sin %9 : vector<1x1920xf32>
    %11 = vector.broadcast %1 : f32 to vector<1x1920xf32>
    %12 = arith.mulf %10, %11 : vector<1x1920xf32>
    %c0_0 = arith.constant 0 : index
    %c0_1 = arith.constant 0 : index
    %13 = vector.load %arg3[%c0_0, %c0_1] : memref<2x1920xf32, #tpu.memory_space<vmem>>, vector<2x1920xf32>
    %14 = vector.broadcast %12 : vector<1x1920xf32> to vector<2x1920xf32>
    %15 = arith.mulf %13, %14 : vector<2x1920xf32>
    %cst = arith.constant -1.000000e+00 : f32
    %cst_2 = arith.constant 1.000000e+00 : f32
    %16 = vector.broadcast %cst : f32 to vector<2x1920xf32>
    %17 = arith.maximumf %16, %15 : vector<2x1920xf32>
    %18 = vector.broadcast %cst_2 : f32 to vector<2x1920xf32>
    %19 = arith.minimumf %18, %17 : vector<2x1920xf32>
    %c0_3 = arith.constant 0 : index
    %c0_4 = arith.constant 0 : index
    %20 = vector.load %arg4[%c0_3, %c0_4] : memref<2x1920xf32, #tpu.memory_space<vmem>>, vector<2x1920xf32>
    tpu.vector_store %arg4[%c0_3, %c0_4], %19 {strides = array<i32>} : memref<2x1920xf32, #tpu.memory_space<vmem>>, vector<2x1920xf32>,
    return
  }
  func.func @transform_0(%arg0: i32, %arg1: i32) -> i32 {
    %c0_i32 = arith.constant 0 : i32
    %c0_i32_0 = arith.constant 0 : i32
    return %c0_i32 : i32
  }
  func.func @transform_1(%arg0: i32, %arg1: i32) -> (i32, i32) {
    %c0_i32 = arith.constant 0 : i32
    return %arg0, %arg1 : i32, i32
  }
  func.func @transform_2(%arg0: i32, %arg1: i32) -> (i32, i32) {
    %c0_i32 = arith.constant 0 : i32
    return %arg0, %arg1 : i32, i32
  }
}

</mosaic_0001>

<llo_original>
// kernel: tpu_custom_call.1
$region0: #{tpu_custom_call.1}
  #allocation0 [shape = 'u32[]', space=smem, size = 0x4, offset = 0x4, fixed_abs, tag = 'smem constant byte address 0x4 - core index']
  #allocation1 [shape = 'u32[144,128]{1,0:T(1,128)}', space=vmem, size = 0x12000, scoped, tag = 'internal scratch']
  %s0 = inlined_call_operand.hbm [shape: f32[2], index: 0, kind: input, shape index: {}]
  %s1 = inlined_call_operand.hbm [shape: f32[2,4000], index: 1, kind: input, shape index: {}]
  %s2 = inlined_call_operand.hbm [shape: f32[2,4000], index: 2, kind: output, shape index: {}]
  %s3 = sld [smem:[#allocation0]]
  $region49: #{tpu_custom_call.1} parent=0
    _
  %s5 = ssub.s32 1, %s3
  %s6 = scalar_select 0, %s5, %s3
  $region1: #{tpu_custom_call.1} parent=0
    #allocation2 [shape = 'u8[512]{0}', space=smem, size = 0x200, scoped, tag = 'input window, operand 0, single buffered']
    #allocation3 [shape = 's32[2]{0}', space=sflag, size = 0x8, scoped, tag = 'scoped memory for tpu_custom_call.1']
    #allocation4 [shape = 's32[2]{0}', space=sflag, size = 0x8, scoped, tag = 'scoped memory for tpu_custom_call.1']
    #allocation5 [shape = 's32[2]{0}', space=sflag, size = 0x8, scoped, tag = 'scoped memory for tpu_custom_call.1']
    #allocation6 [shape = 'u8[30720]{0}', space=vmem, size = 0x7800, scoped, tag = 'input window, operand 1']
    #allocation7 [shape = 'u8[30720]{0}', space=vmem, size = 0x7800, scoped, tag = 'output window, operand 0']
    %7 = vsyncpa [#allocation5], 0
    %8 = vsyncpa [#allocation3], 0
    %s9 = scalar_lea.sflag [#allocation3], 1
    %10 = vsyncpa %s9, 0
    %11 = vsyncpa [#allocation4], 0
    %s12 = scalar_lea.sflag [#allocation4], 1
    %13 = vsyncpa %s12, 0
    loop: start=0, step=1, limit=5
    $region2: #{tpu_custom_call.1} parent=1 // loop_pre_header
      _
    $region3: #{tpu_custom_call.1} parent=1 // loop_header
      %s15 = sphi 0, %s19
      %p16 = scmp.ge.s32.totalorder %s15, 5
      %s22 = sphi 0, %s34
      %s23 = sphi 0, %s30
      %s24 = sphi 0, %s22
      %s25 = sphi 0, %s23
      %s26 = sphi 0, %s24
      %s27 = sphi 0, %s25
      %s35 = sphi 0, %s35
      %s37 = sphi 0, %s35
      %s38 = sphi 0, %s37
      %s52 = sphi 0, %s38
      %s60 = sphi 0, %s62
      %s63 = sphi 0, %s60
      %s64 = sphi 0, %s63
      %s80 = sphi 0, %s64
      %s88 = sphi 0, %s90
      %s91 = sphi 0, %s88
      %s92 = sphi 0, %s91
      %s108 = sphi 0, %s92
    $region4: #{tpu_custom_call.1} parent=1 // loop_header_branch
      %18 = sbr.rel (%p16) target = $region8
    $region5: #{tpu_custom_call.1} parent=1 // loop_body
      %s20 = ssub.s32 %s15, 1
      %s21 = ssub.s32 %s15, 2
      %s28 = sadd.s32 1, %s23
      %p29 = scmp.ge.s32.totalorder %s28, 3
      %s30 = scalar_select %p29, 0, %s28
      %s31 = sadd.s32 1, %s22
      %s32 = scalar_select %p29, %s31, %s22
      %p33 = scmp.ge.s32.totalorder %s32, 1
      %s34 = scalar_select %p33, 0, %s32
      %s36 = sadd.s32 %s35, 1
      %p39 = scmp.eq.s32.totalorder %s15, 2
      %p40 = scmp.ne.s32.totalorder %s35, %s37
      %p41 = scmp.eq.s32.totalorder %s15, 0
      %p42 = por %p40, %p41
      %p43 = scmp.ne.s32.totalorder %s35, %s37
      %p44 = scmp.eq.s32.totalorder %s20, 2
      %p45 = por %p43, %p44
      %p46 = scmp.ne.s32.totalorder %s37, %s38
      %p47 = scmp.eq.s32.totalorder %s20, 0
      %p48 = por %p46, %p47
      %p49 = scmp.ne.s32.totalorder %s37, %s38
      %p50 = scmp.eq.s32.totalorder %s21, 2
      %p51 = por %p49, %p50
      %p53 = scmp.ne.s32.totalorder %s38, %s52
      %p54 = scmp.eq.s32.totalorder %s21, 0
      %p55 = por %p53, %p54
      %s56 = ssub.s32 %s22, %s34
      %s57 = ssub.s32 %s23, %s30
      %s58 = sor.u32 %s56, %s57
      %p59 = scmp.eq.s32.totalorder %s58, 0
      %s61 = sadd.s32 %s60, 1
      %s62 = scalar_select %p59, %s60, %s61
      %p65 = pneg %p59
      %p66 = scmp.eq.s32.totalorder %s15, 2
      %p67 = por %p65, %p66
      %p68 = scmp.ne.s32.totalorder %s60, %s63
      %p69 = scmp.eq.s32.totalorder %s15, 0
      %p70 = por %p68, %p69
      %p71 = scmp.ne.s32.totalorder %s60, %s63
      %p72 = scmp.eq.s32.totalorder %s20, 2
      %p73 = por %p71, %p72
      %p74 = scmp.ne.s32.totalorder %s63, %s64
      %p75 = scmp.eq.s32.totalorder %s20, 0
      %p76 = por %p74, %p75
      %p77 = scmp.ne.s32.totalorder %s63, %s64
      %p78 = scmp.eq.s32.totalorder %s21, 2
      %p79 = por %p77, %p78
      %p81 = scmp.ne.s32.totalorder %s64, %s80
      %p82 = scmp.eq.s32.totalorder %s21, 0
      %p83 = por %p81, %p82
      %s84 = ssub.s32 %s22, %s34
      %s85 = ssub.s32 %s23, %s30
      %s86 = sor.u32 %s84, %s85
      %p87 = scmp.eq.s32.totalorder %s86, 0
      %s89 = sadd.s32 %s88, 1
      %s90 = scalar_select %p87, %s88, %s89
      %p93 = pneg %p87
      %p94 = scmp.eq.s32.totalorder %s15, 2
      %p95 = por %p93, %p94
      %p96 = scmp.ne.s32.totalorder %s88, %s91
      %p97 = scmp.eq.s32.totalorder %s15, 0
      %p98 = por %p96, %p97
      %p99 = scmp.ne.s32.totalorder %s88, %s91
      %p100 = scmp.eq.s32.totalorder %s20, 2
      %p101 = por %p99, %p100
      %p102 = scmp.ne.s32.totalorder %s91, %s92
      %p103 = scmp.eq.s32.totalorder %s20, 0
      %p104 = por %p102, %p103
      %p105 = scmp.ne.s32.totalorder %s91, %s92
      %p106 = scmp.eq.s32.totalorder %s21, 2
      %p107 = por %p105, %p106
      %p109 = scmp.ne.s32.totalorder %s92, %s108
      %p110 = scmp.eq.s32.totalorder %s21, 0
      %p111 = por %p109, %p110
      %p112 = scmp.le.s32.totalorder 1, %s15
      %p113 = scmp.lt.s32.totalorder %s15, 4
      %p114 = pnand %p112, %p113
      %p115 = pneg %p114
      // Predicated region
      $region9: #{tpu_custom_call.1} parent=5 // pred_check
        _
      $region10: #{tpu_custom_call.1} parent=5 // pred_check_branch
        %117 = sbr.rel (%p114) target = $region12
      $region11: #{tpu_custom_call.1} parent=5 // pred_region
        %s118 = ssub.s32 %s15, 1
        // Predicated region
        $region13: #{tpu_custom_call.1} parent=11 // pred_check
          %p119 = pneg %p48
        $region14: #{tpu_custom_call.1} parent=11 // pred_check_branch
          %121 = sbr.rel (%p119) target = $region16
        $region15: #{tpu_custom_call.1} parent=11 // pred_region
          %s123 = ssub.s32 16, 16
          %124 = vsyncadd [#allocation5], %s123
          %127 = dma.hbm_to_smem %s0, 16, [#allocation2], [#allocation5]
        $region16: #{tpu_custom_call.1} parent=11 // pred_fallthru
          _
      $region12: #{tpu_custom_call.1} parent=5 // pred_fallthru
        _
      %p128 = scmp.lt.s32.totalorder %s15, 3
      // Predicated region
      $region17: #{tpu_custom_call.1} parent=5 // pred_check
        %p129 = pneg %p128
      $region18: #{tpu_custom_call.1} parent=5 // pred_check_branch
        %131 = sbr.rel (%p129) target = $region20
      $region19: #{tpu_custom_call.1} parent=5 // pred_region
        // Predicated region
        $region21: #{tpu_custom_call.1} parent=19 // pred_check
          %p132 = pneg %p70
        $region22: #{tpu_custom_call.1} parent=19 // pred_check_branch
          %134 = sbr.rel (%p132) target = $region24
        $region23: #{tpu_custom_call.1} parent=19 // pred_region
          %s135 = sand.u32 %s60, 1
          %s136 = scalar_lea.sflag [#allocation3], %s135
          %s137 = sand.u32 %s60, 1
          %s138 = smul.addr %s137, 30
          %s139 = scalar_lea.vmem [#allocation6], %s138
          %s140 = smul.u32 15, %s23
          %s141 = ssub.s32 32, %s140
          %p142 = scmp.lt.s32.totalorder %s141, 15
          %s143 = scalar_select %p142, %s141, 15
          %s144 = smul.u32 32, %s143
          %s146 = ssub.s32 480, %s144
          %147 = vsyncadd %s136, %s146
          %p148 = scmp.ne.s32.totalorder 0, %s144
          %s149 = smul.addr %s22, 32
          %s150 = sadd.s32 %s140, %s149
          %s151 = smul.addr %s150, 32
          %s152 = scalar_lea.hbm %s1, %s151
          %s153 = smul.u32 %s143, 2
          %s154 = sshll.u32 %s153, 4
          %s155 = sshll.u32 %s139, 4
          %s156 = int_to_ptr.vmem [resolvable:$true] %s155
          %158 = dma.hbm_to_vmem [thread:$0]  (%p148), %s152, %s154, %s156, %s136
        $region24: #{tpu_custom_call.1} parent=19 // pred_fallthru
          _
      $region20: #{tpu_custom_call.1} parent=5 // pred_fallthru
        _
      %p159 = scmp.le.s32.totalorder 1, %s15
      %p160 = scmp.lt.s32.totalorder %s15, 4
      %p161 = pnand %p159, %p160
      %p162 = pneg %p161
      // Predicated region
      $region25: #{tpu_custom_call.1} parent=5 // pred_check
        _
      $region26: #{tpu_custom_call.1} parent=5 // pred_check_branch
        %164 = sbr.rel (%p161) target = $region28
      $region27: #{tpu_custom_call.1} parent=5 // pred_region
        %s165 = ssub.s32 %s15, 1
        // Predicated region
        $region29: #{tpu_custom_call.1} parent=27 // pred_check
          %p166 = pneg %p48
        $region30: #{tpu_custom_call.1} parent=27 // pred_check_branch
          %168 = sbr.rel (%p166) target = $region32
        $region31: #{tpu_custom_call.1} parent=27 // pred_region
          %169 = dma.done [#allocation5], 16
        $region32: #{tpu_custom_call.1} parent=27 // pred_fallthru
          _
        %s170 = sand.u32 %s63, 1
        %s171 = scalar_lea.sflag [#allocation3], %s170
        %s172 = sand.u32 %s63, 1
        %s173 = smul.addr %s172, 30
        %s174 = scalar_lea.vmem [#allocation6], %s173
        // Predicated region
        $region33: #{tpu_custom_call.1} parent=27 // pred_check
          %p175 = pneg %p76
        $region34: #{tpu_custom_call.1} parent=27 // pred_check_branch
          %177 = sbr.rel (%p175) target = $region36
        $region35: #{tpu_custom_call.1} parent=27 // pred_region
          %178 = dma.done %s171, 480
        $region36: #{tpu_custom_call.1} parent=27 // pred_fallthru
          _
        %179 = sfence
        %p180 = pneg %p48
        %p181 = pneg %p45
        %s182 = sand.u32 %s63, 1
        %s183 = scalar_lea.sflag [#allocation3], %s182
        %s184 = sand.u32 %s63, 1
        %s185 = smul.addr %s184, 30
        %s186 = scalar_lea.vmem [#allocation6], %s185
        %p187 = pneg %p76
        %p188 = pneg %p73
        %p189 = pneg %p104
        %p190 = pneg %p101
        %s191 = sand.u32 %s91, 1
        %s192 = scalar_lea.sflag [#allocation4], %s191
        %s193 = sand.u32 %s91, 1
        %s194 = smul.addr %s193, 30
        %s195 = scalar_lea.vmem [#allocation7], %s194
        %s196 = smul.u32 15, %s25
        %s197 = ssub.s32 32, %s196
        %p198 = scmp.lt.s32.totalorder %s197, 15
        %s199 = scalar_select %p198, %s197, 15
        %s200 = smul.u32 32, %s199
        %s201 = smul.u32 15, %s25
        %s202 = ssub.s32 32, %s201
        %p203 = scmp.lt.s32.totalorder %s202, 15
        %s204 = scalar_select %p203, %s202, 15
        %s205 = smul.u32 32, %s204
        %s206 = sld [smem:[#allocation2]]
        %s207 = sld [smem:[#allocation2 + $0x1]]
        %s208 = smul.u32 %s25, 1920
        %s209 = scvt.s32.f32 %s208
        %v210 = vlaneseq
        %v211 = vand.u32 %v210, 127
        %v212 = vadd.s32 %v211, 128
        %v213 = vadd.s32 %v211, 256
        %v214 = vadd.s32 %v211, 384
        %v215 = vadd.s32 %v211, 512
        %v216 = vadd.s32 %v211, 640
        %v217 = vadd.s32 %v211, 768
        %v218 = vadd.s32 %v211, 896
        %v219 = vadd.s32 %v211, 1024
        %v220 = vadd.s32 %v211, 1152
        %v221 = vadd.s32 %v211, 1280
        %v222 = vadd.s32 %v211, 1408
        %v223 = vadd.s32 %v211, 1536
        %v224 = vadd.s32 %v211, 1664
        %v225 = vadd.s32 %v211, 1792
        %v226 = vcvt.s32.f32 %v211
        %v227 = vcvt.s32.f32 %v212
        %v228 = vcvt.s32.f32 %v213
        %v229 = vcvt.s32.f32 %v214
        %v230 = vcvt.s32.f32 %v215
        %v231 = vcvt.s32.f32 %v216
        %v232 = vcvt.s32.f32 %v217
        %v233 = vcvt.s32.f32 %v218
        %v234 = vcvt.s32.f32 %v219
        %v235 = vcvt.s32.f32 %v220
        %v236 = vcvt.s32.f32 %v221
        %v237 = vcvt.s32.f32 %v222
        %v238 = vcvt.s32.f32 %v223
        %v239 = vcvt.s32.f32 %v224
        %v240 = vcvt.s32.f32 %v225
        %v241 = vstv %s209
        %v242 = vadd.f32 %v241, %v226
        %v243 = vadd.f32 %v241, %v227
        %v244 = vadd.f32 %v241, %v228
        %v245 = vadd.f32 %v241, %v229
        %v246 = vadd.f32 %v241, %v230
        %v247 = vadd.f32 %v241, %v231
        %v248 = vadd.f32 %v241, %v232
        %v249 = vadd.f32 %v241, %v233
        %v250 = vadd.f32 %v241, %v234
        %v251 = vadd.f32 %v241, %v235
        %v252 = vadd.f32 %v241, %v236
        %v253 = vadd.f32 %v241, %v237
        %v254 = vadd.f32 %v241, %v238
        %v255 = vadd.f32 %v241, %v239
        %v256 = vadd.f32 %v241, %v240
        %v257 = vstv %s206
        %v258 = vmul.f32 %v242, %v257
        %v259 = vmul.f32 %v243, %v257
        %v260 = vmul.f32 %v244, %v257
        %v261 = vmul.f32 %v245, %v257
        %v262 = vmul.f32 %v246, %v257
        %v263 = vmul.f32 %v247, %v257
        %v264 = vmul.f32 %v248, %v257
        %v265 = vmul.f32 %v249, %v257
        %v266 = vmul.f32 %v250, %v257
        %v267 = vmul.f32 %v251, %v257
        %v268 = vmul.f32 %v252, %v257
        %v269 = vmul.f32 %v253, %v257
        %v270 = vmul.f32 %v254, %v257
        %v271 = vmul.f32 %v255, %v257
        %v272 = vmul.f32 %v256, %v257
        %v273 = vand.u32 2147483647, %v258
        %vm274 = vcmp.le.f32.partialorder %v273, 0.7853982
        %vm275 = vcmp.lt.s32.totalorder %v258, 0
        %v276 = vand.u32 %v258, 2139095040
        %v277 = vshrl.u32 %v276, 23
        %v278 = vsub.s32 %v277, 127
        %v279 = vand.u32 2147483647, %v258
        %v280 = vand.u32 %v279, 8388607
        %v281 = vor.u32 %v280, 8388608
        %v282 = vsub.s32 0, %v281
        %v283 = vadd.s32 %v278, 1
        %vm284 = vcmp.gt.s32.totalorder %v283, 0
        %v285 = vsel %vm284, %v283, 0
        %v286 = vshrl.u32 %v285, 5
        %v287 = vand.u32 %v285, 31
        %v288 = vsub.s32 32, %v287
        %v289 = vshrl.u32 683565275, %v288
        %v290 = vshll.u32 683565275, %v287
        %v291 = vshrl.u32 2475754826, %v288
        %v292 = vor.u32 %v290, %v291
        %v293 = vshll.u32 2475754826, %v287
        %v294 = vshrl.u32 2131351028, %v288
        %v295 = vor.u32 %v293, %v294
        %v296 = vshll.u32 2131351028, %v287
        %v297 = vshrl.u32 2102212464, %v288
        %v298 = vor.u32 %v296, %v297
        %v299 = vshll.u32 2102212464, %v287
        %v300 = vshrl.u32 920167782, %v288
        %v301 = vor.u32 %v299, %v300
        %v302 = vshll.u32 920167782, %v287
        %v303 = vshrl.u32 1326507024, %v288
        %v304 = vor.u32 %v302, %v303
        %vm305 = vcmp.lt.s32.totalorder %v286, 1
        %vm306 = vcmp.lt.s32.totalorder %v286, 2
        %vm307 = vcmp.lt.s32.totalorder %v286, 3
        %vm308 = vcmp.lt.s32.totalorder %v286, 4
        %v309 = vsel %vm305, %v289, %v292
        %v310 = vsel %vm308, %v298, 2102212464
        %v311 = vsel %vm307, %v295, %v310
        %v312 = vsel %vm306, %v309, %v311
        %v313 = vsel %vm305, %v292, %v295
        %v314 = vsel %vm308, %v301, 920167782
        %v315 = vsel %vm307, %v298, %v314
        %v316 = vsel %vm306, %v313, %v315
        %v317 = vsel %vm305, %v295, %v298
        %v318 = vsel %vm308, %v304, 1326507024
        %v319 = vsel %vm307, %v301, %v318
        %v320 = vsel %vm306, %v317, %v319
        %v321 = vshll.u32 %v281, 8
        %v322 = vmul.u32.u64.compose %v321, %v320
        %v323 = vextract.low.u32 %v322
        %v324 = vextract.high.u32 %v322
        %v325 = vmul.u32.u64.compose %v321, %v316
        %v326 = vextract.low.u32 %v325
        %v327 = vextract.high.u32 %v325
        %v328 = vmul.u32 %v321, %v312
        %v329 = vadd.s32 %v324, %v326
        %vm330 = vc.u32 %v324, %v326
        %v331 = vadd.s32 %v327, 1
        %v332 = vsel %vm330, %v331, %v327
        %v333 = vadd.s32 %v328, %v332
        %v334 = vadd.s32 %v333, 536870912
        %v335 = vshrl.u32 %v334, 30
        %v336 = vshll.u32 %v335, 30
        %v337 = vsub.s32 %v333, %v336
        %vm338 = vcmp.lt.s32.totalorder %v337, 0
        %v339 = vsub.s32 0, %v337
        %v340 = vsel %vm338, %v339, %v337
        %v341 = vclz %v340
        %v342 = vsub.s32 %v341, 2
        %vm343 = vcmp.gt.s32.totalorder 0, %v342
        %v344 = vsel %vm343, 0, %v342
        %v345 = vsub.s32 32, %v344
        %v346 = vshll.u32 %v337, %v344
        %v347 = vshrl.u32 %v329, %v345
        %v348 = vor.u32 %v346, %v347
        %v349 = vsub.s32 4294967266, %v344
        %v350 = vadd.s32 %v349, 127
        %v351 = vshll.u32 %v350, 23
        %v352 = vor.u32 4788187, %v351
        %v353 = vand.u32 2147483647, %v352
        %v355 = vcvt.s32.f32 %v348
        %v356 = vmul.f32 %v355, %v353
        %v357 = vxor.u32 %v356, 2147483648
        %v358 = vsel %vm275, %v357, %v356
        %v359 = vsub.s32 4, %v335
        %v360 = vsel %vm275, %v359, %v335
        %v361 = vsel %vm274, %v258, %v358
        %v362 = vsel %vm274, 0, %v360
        %v363 = vcosq.f32.pop %v361
        %v364 = vsinq.f32.pop %v361
        %vm365 = vweird.f32 %v258
        %v366 = vadd.s32 %v362, 3
        %v367 = vand.u32 %v366, 3
        %vm368 = vcmp.lt.s32.totalorder %v367, 2
        %vm369 = vcmp.eq.s32.totalorder %v367, 0
        %v370 = vxor.u32 %v364, 2147483648
        %v371 = vsel %vm369, %v363, %v370
        %vm372 = vcmp.eq.s32.totalorder %v367, 2
        %v373 = vxor.u32 %v363, 2147483648
        %v374 = vsel %vm372, %v373, %v364
        %v375 = vsel %vm368, %v371, %v374
        %v376 = vsel %vm365, nan, %v375
        %v377 = vand.u32 2147483647, %v259
        %vm378 = vcmp.le.f32.partialorder %v377, 0.7853982
        %vm379 = vcmp.lt.s32.totalorder %v259, 0
        %v380 = vand.u32 %v259, 2139095040
        %v381 = vshrl.u32 %v380, 23
        %v382 = vsub.s32 %v381, 127
        %v383 = vand.u32 2147483647, %v259
        %v384 = vand.u32 %v383, 8388607
        %v385 = vor.u32 %v384, 8388608
        %v386 = vsub.s32 0, %v385
        %v387 = vadd.s32 %v382, 1
        %vm388 = vcmp.gt.s32.totalorder %v387, 0
        %v389 = vsel %vm388, %v387, 0
        %v390 = vshrl.u32 %v389, 5
        %v391 = vand.u32 %v389, 31
        %v392 = vsub.s32 32, %v391
        %v393 = vshrl.u32 683565275, %v392
        %v394 = vshll.u32 683565275, %v391
        %v395 = vshrl.u32 2475754826, %v392
        %v396 = vor.u32 %v394, %v395
        %v397 = vshll.u32 2475754826, %v391
        %v398 = vshrl.u32 2131351028, %v392
        %v399 = vor.u32 %v397, %v398
        %v400 = vshll.u32 2131351028, %v391
        %v401 = vshrl.u32 2102212464, %v392
        %v402 = vor.u32 %v400, %v401
        %v403 = vshll.u32 2102212464, %v391
        %v404 = vshrl.u32 920167782, %v392
        %v405 = vor.u32 %v403, %v404
        %v406 = vshll.u32 920167782, %v391
        %v407 = vshrl.u32 1326507024, %v392
        %v408 = vor.u32 %v406, %v407
        %vm409 = vcmp.lt.s32.totalorder %v390, 1
        %vm410 = vcmp.lt.s32.totalorder %v390, 2
        %vm411 = vcmp.lt.s32.totalorder %v390, 3
        %vm412 = vcmp.lt.s32.totalorder %v390, 4
        %v413 = vsel %vm409, %v393, %v396
        %v414 = vsel %vm412, %v402, 2102212464
        %v415 = vsel %vm411, %v399, %v414
        %v416 = vsel %vm410, %v413, %v415
        %v417 = vsel %vm409, %v396, %v399
        %v418 = vsel %vm412, %v405, 920167782
        %v419 = vsel %vm411, %v402, %v418
        %v420 = vsel %vm410, %v417, %v419
        %v421 = vsel %vm409, %v399, %v402
        %v422 = vsel %vm412, %v408, 1326507024
        %v423 = vsel %vm411, %v405, %v422
        %v424 = vsel %vm410, %v421, %v423
        %v425 = vshll.u32 %v385, 8
        %v426 = vmul.u32.u64.compose %v425, %v424
        %v427 = vextract.low.u32 %v426
        %v428 = vextract.high.u32 %v426
        %v429 = vmul.u32.u64.compose %v425, %v420
        %v430 = vextract.low.u32 %v429
        %v431 = vextract.high.u32 %v429
        %v432 = vmul.u32 %v425, %v416
        %v433 = vadd.s32 %v428, %v430
        %vm434 = vc.u32 %v428, %v430
        %v435 = vadd.s32 %v431, 1
        %v436 = vsel %vm434, %v435, %v431
        %v437 = vadd.s32 %v432, %v436
        %v438 = vadd.s32 %v437, 536870912
        %v439 = vshrl.u32 %v438, 30
        %v440 = vshll.u32 %v439, 30
        %v441 = vsub.s32 %v437, %v440
        %vm442 = vcmp.lt.s32.totalorder %v441, 0
        %v443 = vsub.s32 0, %v441
        %v444 = vsel %vm442, %v443, %v441
        %v445 = vclz %v444
        %v446 = vsub.s32 %v445, 2
        %vm447 = vcmp.gt.s32.totalorder 0, %v446
        %v448 = vsel %vm447, 0, %v446
        %v449 = vsub.s32 32, %v448
        %v450 = vshll.u32 %v441, %v448
        %v451 = vshrl.u32 %v433, %v449
        %v452 = vor.u32 %v450, %v451
        %v453 = vsub.s32 4294967266, %v448
        %v454 = vadd.s32 %v453, 127
        %v455 = vshll.u32 %v454, 23
        %v456 = vor.u32 4788187, %v455
        %v457 = vand.u32 2147483647, %v456
        %v459 = vcvt.s32.f32 %v452
        %v460 = vmul.f32 %v459, %v457
        %v461 = vxor.u32 %v460, 2147483648
        %v462 = vsel %vm379, %v461, %v460
        %v463 = vsub.s32 4, %v439
        %v464 = vsel %vm379, %v463, %v439
        %v465 = vsel %vm378, %v259, %v462
        %v466 = vsel %vm378, 0, %v464
        %v467 = vcosq.f32.pop %v465
        %v468 = vsinq.f32.pop %v465
        %vm469 = vweird.f32 %v259
        %v470 = vadd.s32 %v466, 3
        %v471 = vand.u32 %v470, 3
        %vm472 = vcmp.lt.s32.totalorder %v471, 2
        %vm473 = vcmp.eq.s32.totalorder %v471, 0
        %v474 = vxor.u32 %v468, 2147483648
        %v475 = vsel %vm473, %v467, %v474
        %vm476 = vcmp.eq.s32.totalorder %v471, 2
        %v477 = vxor.u32 %v467, 2147483648
        %v478 = vsel %vm476, %v477, %v468
        %v479 = vsel %vm472, %v475, %v478
        %v480 = vsel %vm469, nan, %v479
        %v481 = vand.u32 2147483647, %v260
        %vm482 = vcmp.le.f32.partialorder %v481, 0.7853982
        %vm483 = vcmp.lt.s32.totalorder %v260, 0
        %v484 = vand.u32 %v260, 2139095040
        %v485 = vshrl.u32 %v484, 23
        %v486 = vsub.s32 %v485, 127
        %v487 = vand.u32 2147483647, %v260
        %v488 = vand.u32 %v487, 8388607
        %v489 = vor.u32 %v488, 8388608
        %v490 = vsub.s32 0, %v489
        %v491 = vadd.s32 %v486, 1
        %vm492 = vcmp.gt.s32.totalorder %v491, 0
        %v493 = vsel %vm492, %v491, 0
        %v494 = vshrl.u32 %v493, 5
        %v495 = vand.u32 %v493, 31
        %v496 = vsub.s32 32, %v495
        %v497 = vshrl.u32 683565275, %v496
        %v498 = vshll.u32 683565275, %v495
        %v499 = vshrl.u32 2475754826, %v496
        %v500 = vor.u32 %v498, %v499
        %v501 = vshll.u32 2475754826, %v495
        %v502 = vshrl.u32 2131351028, %v496
        %v503 = vor.u32 %v501, %v502
        %v504 = vshll.u32 2131351028, %v495
        %v505 = vshrl.u32 2102212464, %v496
        %v506 = vor.u32 %v504, %v505
        %v507 = vshll.u32 2102212464, %v495
        %v508 = vshrl.u32 920167782, %v496
        %v509 = vor.u32 %v507, %v508
        %v510 = vshll.u32 920167782, %v495
        %v511 = vshrl.u32 1326507024, %v496
        %v512 = vor.u32 %v510, %v511
        %vm513 = vcmp.lt.s32.totalorder %v494, 1
        %vm514 = vcmp.lt.s32.totalorder %v494, 2
        %vm515 = vcmp.lt.s32.totalorder %v494, 3
        %vm516 = vcmp.lt.s32.totalorder %v494, 4
        %v517 = vsel %vm513, %v497, %v500
        %v518 = vsel %vm516, %v506, 2102212464
        %v519 = vsel %vm515, %v503, %v518
        %v520 = vsel %vm514, %v517, %v519
        %v521 = vsel %vm513, %v500, %v503
        %v522 = vsel %vm516, %v509, 920167782
        %v523 = vsel %vm515, %v506, %v522
        %v524 = vsel %vm514, %v521, %v523
        %v525 = vsel %vm513, %v503, %v506
        %v526 = vsel %vm516, %v512, 1326507024
        %v527 = vsel %vm515, %v509, %v526
        %v528 = vsel %vm514, %v525, %v527
        %v529 = vshll.u32 %v489, 8
        %v530 = vmul.u32.u64.compose %v529, %v528
        %v531 = vextract.low.u32 %v530
        %v532 = vextract.high.u32 %v530
        %v533 = vmul.u32.u64.compose %v529, %v524
        %v534 = vextract.low.u32 %v533
        %v535 = vextract.high.u32 %v533
        %v536 = vmul.u32 %v529, %v520
        %v537 = vadd.s32 %v532, %v534
        %vm538 = vc.u32 %v532, %v534
        %v539 = vadd.s32 %v535, 1
        %v540 = vsel %vm538, %v539, %v535
        %v541 = vadd.s32 %v536, %v540
        %v542 = vadd.s32 %v541, 536870912
        %v543 = vshrl.u32 %v542, 30
        %v544 = vshll.u32 %v543, 30
        %v545 = vsub.s32 %v541, %v544
        %vm546 = vcmp.lt.s32.totalorder %v545, 0
        %v547 = vsub.s32 0, %v545
        %v548 = vsel %vm546, %v547, %v545
        %v549 = vclz %v548
        %v550 = vsub.s32 %v549, 2
        %vm551 = vcmp.gt.s32.totalorder 0, %v550
        %v552 = vsel %vm551, 0, %v550
        %v553 = vsub.s32 32, %v552
        %v554 = vshll.u32 %v545, %v552
        %v555 = vshrl.u32 %v537, %v553
        %v556 = vor.u32 %v554, %v555
        %v557 = vsub.s32 4294967266, %v552
        %v558 = vadd.s32 %v557, 127
        %v559 = vshll.u32 %v558, 23
        %v560 = vor.u32 4788187, %v559
        %v561 = vand.u32 2147483647, %v560
        %v563 = vcvt.s32.f32 %v556
        %v564 = vmul.f32 %v563, %v561
        %v565 = vxor.u32 %v564, 2147483648
        %v566 = vsel %vm483, %v565, %v564
        %v567 = vsub.s32 4, %v543
        %v568 = vsel %vm483, %v567, %v543
        %v569 = vsel %vm482, %v260, %v566
        %v570 = vsel %vm482, 0, %v568
        %v571 = vcosq.f32.pop %v569
        %v572 = vsinq.f32.pop %v569
        %vm573 = vweird.f32 %v260
        %v574 = vadd.s32 %v570, 3
        %v575 = vand.u32 %v574, 3
        %vm576 = vcmp.lt.s32.totalorder %v575, 2
        %vm577 = vcmp.eq.s32.totalorder %v575, 0
        %v578 = vxor.u32 %v572, 2147483648
        %v579 = vsel %vm577, %v571, %v578
        %vm580 = vcmp.eq.s32.totalorder %v575, 2
        %v581 = vxor.u32 %v571, 2147483648
        %v582 = vsel %vm580, %v581, %v572
        %v583 = vsel %vm576, %v579, %v582
        %v584 = vsel %vm573, nan, %v583
        %v585 = vand.u32 2147483647, %v261
        %vm586 = vcmp.le.f32.partialorder %v585, 0.7853982
        %vm587 = vcmp.lt.s32.totalorder %v261, 0
        %v588 = vand.u32 %v261, 2139095040
        %v589 = vshrl.u32 %v588, 23
        %v590 = vsub.s32 %v589, 127
        %v591 = vand.u32 2147483647, %v261
        %v592 = vand.u32 %v591, 8388607
        %v593 = vor.u32 %v592, 8388608
        %v594 = vsub.s32 0, %v593
        %v595 = vadd.s32 %v590, 1
        %vm596 = vcmp.gt.s32.totalorder %v595, 0
        %v597 = vsel %vm596, %v595, 0
        %v598 = vshrl.u32 %v597, 5
        %v599 = vand.u32 %v597, 31
        %v600 = vsub.s32 32, %v599
        %v601 = vshrl.u32 683565275, %v600
        %v602 = vshll.u32 683565275, %v599
        %v603 = vshrl.u32 2475754826, %v600
        %v604 = vor.u32 %v602, %v603
        %v605 = vshll.u32 2475754826, %v599
        %v606 = vshrl.u32 2131351028, %v600
        %v607 = vor.u32 %v605, %v606
        %v608 = vshll.u32 2131351028, %v599
        %v609 = vshrl.u32 2102212464, %v600
        %v610 = vor.u32 %v608, %v609
        %v611 = vshll.u32 2102212464, %v599
        %v612 = vshrl.u32 920167782, %v600
        %v613 = vor.u32 %v611, %v612
        %v614 = vshll.u32 920167782, %v599
        %v615 = vshrl.u32 1326507024, %v600
        %v616 = vor.u32 %v614, %v615
        %vm617 = vcmp.lt.s32.totalorder %v598, 1
        %vm618 = vcmp.lt.s32.totalorder %v598, 2
        %vm619 = vcmp.lt.s32.totalorder %v598, 3
        %vm620 = vcmp.lt.s32.totalorder %v598, 4
        %v621 = vsel %vm617, %v601, %v604
        %v622 = vsel %vm620, %v610, 2102212464
        %v623 = vsel %vm619, %v607, %v622
        %v624 = vsel %vm618, %v621, %v623
        %v625 = vsel %vm617, %v604, %v607
        %v626 = vsel %vm620, %v613, 920167782
        %v627 = vsel %vm619, %v610, %v626
        %v628 = vsel %vm618, %v625, %v627
        %v629 = vsel %vm617, %v607, %v610
        %v630 = vsel %vm620, %v616, 1326507024
        %v631 = vsel %vm619, %v613, %v630
        %v632 = vsel %vm618, %v629, %v631
        %v633 = vshll.u32 %v593, 8
        %v634 = vmul.u32.u64.compose %v633, %v632
        %v635 = vextract.low.u32 %v634
        %v636 = vextract.high.u32 %v634
        %v637 = vmul.u32.u64.compose %v633, %v628
        %v638 = vextract.low.u32 %v637
        %v639 = vextract.high.u32 %v637
        %v640 = vmul.u32 %v633, %v624
        %v641 = vadd.s32 %v636, %v638
        %vm642 = vc.u32 %v636, %v638
        %v643 = vadd.s32 %v639, 1
        %v644 = vsel %vm642, %v643, %v639
        %v645 = vadd.s32 %v640, %v644
        %v646 = vadd.s32 %v645, 536870912
        %v647 = vshrl.u32 %v646, 30
        %v648 = vshll.u32 %v647, 30
        %v649 = vsub.s32 %v645, %v648
        %vm650 = vcmp.lt.s32.totalorder %v649, 0
        %v651 = vsub.s32 0, %v649
        %v652 = vsel %vm650, %v651, %v649
        %v653 = vclz %v652
        %v654 = vsub.s32 %v653, 2
        %vm655 = vcmp.gt.s32.totalorder 0, %v654
        %v656 = vsel %vm655, 0, %v654
        %v657 = vsub.s32 32, %v656
        %v658 = vshll.u32 %v649, %v656
        %v659 = vshrl.u32 %v641, %v657
        %v660 = vor.u32 %v658, %v659
        %v661 = vsub.s32 4294967266, %v656
        %v662 = vadd.s32 %v661, 127
        %v663 = vshll.u32 %v662, 23
        %v664 = vor.u32 4788187, %v663
        %v665 = vand.u32 2147483647, %v664
        %v667 = vcvt.s32.f32 %v660
        %v668 = vmul.f32 %v667, %v665
        %v669 = vxor.u32 %v668, 2147483648
        %v670 = vsel %vm587, %v669, %v668
        %v671 = vsub.s32 4, %v647
        %v672 = vsel %vm587, %v671, %v647
        %v673 = vsel %vm586, %v261, %v670
        %v674 = vsel %vm586, 0, %v672
        %v675 = vcosq.f32.pop %v673
        %v676 = vsinq.f32.pop %v673
        %vm677 = vweird.f32 %v261
        %v678 = vadd.s32 %v674, 3
        %v679 = vand.u32 %v678, 3
        %vm680 = vcmp.lt.s32.totalorder %v679, 2
        %vm681 = vcmp.eq.s32.totalorder %v679, 0
        %v682 = vxor.u32 %v676, 2147483648
        %v683 = vsel %vm681, %v675, %v682
        %vm684 = vcmp.eq.s32.totalorder %v679, 2
        %v685 = vxor.u32 %v675, 2147483648
        %v686 = vsel %vm684, %v685, %v676
        %v687 = vsel %vm680, %v683, %v686
        %v688 = vsel %vm677, nan, %v687
        %v689 = vand.u32 2147483647, %v262
        %vm690 = vcmp.le.f32.partialorder %v689, 0.7853982
        %vm691 = vcmp.lt.s32.totalorder %v262, 0
        %v692 = vand.u32 %v262, 2139095040
        %v693 = vshrl.u32 %v692, 23
        %v694 = vsub.s32 %v693, 127
        %v695 = vand.u32 2147483647, %v262
        %v696 = vand.u32 %v695, 8388607
        %v697 = vor.u32 %v696, 8388608
        %v698 = vsub.s32 0, %v697
        %v699 = vadd.s32 %v694, 1
        %vm700 = vcmp.gt.s32.totalorder %v699, 0
        %v701 = vsel %vm700, %v699, 0
        %v702 = vshrl.u32 %v701, 5
        %v703 = vand.u32 %v701, 31
        %v704 = vsub.s32 32, %v703
        %v705 = vshrl.u32 683565275, %v704
        %v706 = vshll.u32 683565275, %v703
        %v707 = vshrl.u32 2475754826, %v704
        %v708 = vor.u32 %v706, %v707
        %v709 = vshll.u32 2475754826, %v703
        %v710 = vshrl.u32 2131351028, %v704
        %v711 = vor.u32 %v709, %v710
        %v712 = vshll.u32 2131351028, %v703
        %v713 = vshrl.u32 2102212464, %v704
        %v714 = vor.u32 %v712, %v713
        %v715 = vshll.u32 2102212464, %v703
        %v716 = vshrl.u32 920167782, %v704
        %v717 = vor.u32 %v715, %v716
        %v718 = vshll.u32 920167782, %v703
        %v719 = vshrl.u32 1326507024, %v704
        %v720 = vor.u32 %v718, %v719
        %vm721 = vcmp.lt.s32.totalorder %v702, 1
        %vm722 = vcmp.lt.s32.totalorder %v702, 2
        %vm723 = vcmp.lt.s32.totalorder %v702, 3
        %vm724 = vcmp.lt.s32.totalorder %v702, 4
        %v725 = vsel %vm721, %v705, %v708
        %v726 = vsel %vm724, %v714, 2102212464
        %v727 = vsel %vm723, %v711, %v726
        %v728 = vsel %vm722, %v725, %v727
        %v729 = vsel %vm721, %v708, %v711
        %v730 = vsel %vm724, %v717, 920167782
        %v731 = vsel %vm723, %v714, %v730
        %v732 = vsel %vm722, %v729, %v731
        %v733 = vsel %vm721, %v711, %v714
        %v734 = vsel %vm724, %v720, 1326507024
        %v735 = vsel %vm723, %v717, %v734
        %v736 = vsel %vm722, %v733, %v735
        %v737 = vshll.u32 %v697, 8
        %v738 = vmul.u32.u64.compose %v737, %v736
        %v739 = vextract.low.u32 %v738
        %v740 = vextract.high.u32 %v738
        %v741 = vmul.u32.u64.compose %v737, %v732
        %v742 = vextract.low.u32 %v741
        %v743 = vextract.high.u32 %v741
        %v744 = vmul.u32 %v737, %v728
        %v745 = vadd.s32 %v740, %v742
        %vm746 = vc.u32 %v740, %v742
        %v747 = vadd.s32 %v743, 1
        %v748 = vsel %vm746, %v747, %v743
        %v749 = vadd.s32 %v744, %v748
        %v750 = vadd.s32 %v749, 536870912
        %v751 = vshrl.u32 %v750, 30
        %v752 = vshll.u32 %v751, 30
        %v753 = vsub.s32 %v749, %v752
        %vm754 = vcmp.lt.s32.totalorder %v753, 0
        %v755 = vsub.s32 0, %v753
        %v756 = vsel %vm754, %v755, %v753
        %v757 = vclz %v756
        %v758 = vsub.s32 %v757, 2
        %vm759 = vcmp.gt.s32.totalorder 0, %v758
        %v760 = vsel %vm759, 0, %v758
        %v761 = vsub.s32 32, %v760
        %v762 = vshll.u32 %v753, %v760
        %v763 = vshrl.u32 %v745, %v761
        %v764 = vor.u32 %v762, %v763
        %v765 = vsub.s32 4294967266, %v760
        %v766 = vadd.s32 %v765, 127
        %v767 = vshll.u32 %v766, 23
        %v768 = vor.u32 4788187, %v767
        %v769 = vand.u32 2147483647, %v768
        %v771 = vcvt.s32.f32 %v764
        %v772 = vmul.f32 %v771, %v769
        %v773 = vxor.u32 %v772, 2147483648
        %v774 = vsel %vm691, %v773, %v772
        %v775 = vsub.s32 4, %v751
        %v776 = vsel %vm691, %v775, %v751
        %v777 = vsel %vm690, %v262, %v774
        %v778 = vsel %vm690, 0, %v776
        %v779 = vcosq.f32.pop %v777
        %v780 = vsinq.f32.pop %v777
        %vm781 = vweird.f32 %v262
        %v782 = vadd.s32 %v778, 3
        %v783 = vand.u32 %v782, 3
        %vm784 = vcmp.lt.s32.totalorder %v783, 2
        %vm785 = vcmp.eq.s32.totalorder %v783, 0
        %v786 = vxor.u32 %v780, 2147483648
        %v787 = vsel %vm785, %v779, %v786
        %vm788 = vcmp.eq.s32.totalorder %v783, 2
        %v789 = vxor.u32 %v779, 2147483648
        %v790 = vsel %vm788, %v789, %v780
        %v791 = vsel %vm784, %v787, %v790
        %v792 = vsel %vm781, nan, %v791
        %v793 = vand.u32 2147483647, %v263
        %vm794 = vcmp.le.f32.partialorder %v793, 0.7853982
        %vm795 = vcmp.lt.s32.totalorder %v263, 0
        %v796 = vand.u32 %v263, 2139095040
        %v797 = vshrl.u32 %v796, 23
        %v798 = vsub.s32 %v797, 127
        %v799 = vand.u32 2147483647, %v263
        %v800 = vand.u32 %v799, 8388607
        %v801 = vor.u32 %v800, 8388608
        %v802 = vsub.s32 0, %v801
        %v803 = vadd.s32 %v798, 1
        %vm804 = vcmp.gt.s32.totalorder %v803, 0
        %v805 = vsel %vm804, %v803, 0
        %v806 = vshrl.u32 %v805, 5
        %v807 = vand.u32 %v805, 31
        %v808 = vsub.s32 32, %v807
        %v809 = vshrl.u32 683565275, %v808
        %v810 = vshll.u32 683565275, %v807
        %v811 = vshrl.u32 2475754826, %v808
        %v812 = vor.u32 %v810, %v811
        %v813 = vshll.u32 2475754826, %v807
        %v814 = vshrl.u32 2131351028, %v808
        %v815 = vor.u32 %v813, %v814
        %v816 = vshll.u32 2131351028, %v807
        %v817 = vshrl.u32 2102212464, %v808
        %v818 = vor.u32 %v816, %v817
        %v819 = vshll.u32 2102212464, %v807
        %v820 = vshrl.u32 920167782, %v808
        %v821 = vor.u32 %v819, %v820
        %v822 = vshll.u32 920167782, %v807
        %v823 = vshrl.u32 1326507024, %v808
        %v824 = vor.u32 %v822, %v823
        %vm825 = vcmp.lt.s32.totalorder %v806, 1
        %vm826 = vcmp.lt.s32.totalorder %v806, 2
        %vm827 = vcmp.lt.s32.totalorder %v806, 3
        %vm828 = vcmp.lt.s32.totalorder %v806, 4
        %v829 = vsel %vm825, %v809, %v812
        %v830 = vsel %vm828, %v818, 2102212464
        %v831 = vsel %vm827, %v815, %v830
        %v832 = vsel %vm826, %v829, %v831
        %v833 = vsel %vm825, %v812, %v815
        %v834 = vsel %vm828, %v821, 920167782
        %v835 = vsel %vm827, %v818, %v834
        %v836 = vsel %vm826, %v833, %v835
        %v837 = vsel %vm825, %v815, %v818
        %v838 = vsel %vm828, %v824, 1326507024
        %v839 = vsel %vm827, %v821, %v838
        %v840 = vsel %vm826, %v837, %v839
        %v841 = vshll.u32 %v801, 8
        %v842 = vmul.u32.u64.compose %v841, %v840
        %v843 = vextract.low.u32 %v842
        %v844 = vextract.high.u32 %v842
        %v845 = vmul.u32.u64.compose %v841, %v836
        %v846 = vextract.low.u32 %v845
        %v847 = vextract.high.u32 %v845
        %v848 = vmul.u32 %v841, %v832
        %v849 = vadd.s32 %v844, %v846
        %vm850 = vc.u32 %v844, %v846
        %v851 = vadd.s32 %v847, 1
        %v852 = vsel %vm850, %v851, %v847
        %v853 = vadd.s32 %v848, %v852
        %v854 = vadd.s32 %v853, 536870912
        %v855 = vshrl.u32 %v854, 30
        %v856 = vshll.u32 %v855, 30
        %v857 = vsub.s32 %v853, %v856
        %vm858 = vcmp.lt.s32.totalorder %v857, 0
        %v859 = vsub.s32 0, %v857
        %v860 = vsel %vm858, %v859, %v857
        %v861 = vclz %v860
        %v862 = vsub.s32 %v861, 2
        %vm863 = vcmp.gt.s32.totalorder 0, %v862
        %v864 = vsel %vm863, 0, %v862
        %v865 = vsub.s32 32, %v864
        %v866 = vshll.u32 %v857, %v864
        %v867 = vshrl.u32 %v849, %v865
        %v868 = vor.u32 %v866, %v867
        %v869 = vsub.s32 4294967266, %v864
        %v870 = vadd.s32 %v869, 127
        %v871 = vshll.u32 %v870, 23
        %v872 = vor.u32 4788187, %v871
        %v873 = vand.u32 2147483647, %v872
        %v875 = vcvt.s32.f32 %v868
        %v876 = vmul.f32 %v875, %v873
        %v877 = vxor.u32 %v876, 2147483648
        %v878 = vsel %vm795, %v877, %v876
        %v879 = vsub.s32 4, %v855
        %v880 = vsel %vm795, %v879, %v855
        %v881 = vsel %vm794, %v263, %v878
        %v882 = vsel %vm794, 0, %v880
        %v883 = vcosq.f32.pop %v881
        %v884 = vsinq.f32.pop %v881
        %vm885 = vweird.f32 %v263
        %v886 = vadd.s32 %v882, 3
        %v887 = vand.u32 %v886, 3
        %vm888 = vcmp.lt.s32.totalorder %v887, 2
        %vm889 = vcmp.eq.s32.totalorder %v887, 0
        %v890 = vxor.u32 %v884, 2147483648
        %v891 = vsel %vm889, %v883, %v890
        %vm892 = vcmp.eq.s32.totalorder %v887, 2
        %v893 = vxor.u32 %v883, 2147483648
        %v894 = vsel %vm892, %v893, %v884
        %v895 = vsel %vm888, %v891, %v894
        %v896 = vsel %vm885, nan, %v895
        %v897 = vand.u32 2147483647, %v264
        %vm898 = vcmp.le.f32.partialorder %v897, 0.7853982
        %vm899 = vcmp.lt.s32.totalorder %v264, 0
        %v900 = vand.u32 %v264, 2139095040
        %v901 = vshrl.u32 %v900, 23
        %v902 = vsub.s32 %v901, 127
        %v903 = vand.u32 2147483647, %v264
        %v904 = vand.u32 %v903, 8388607
        %v905 = vor.u32 %v904, 8388608
        %v906 = vsub.s32 0, %v905
        %v907 = vadd.s32 %v902, 1
        %vm908 = vcmp.gt.s32.totalorder %v907, 0
        %v909 = vsel %vm908, %v907, 0
        %v910 = vshrl.u32 %v909, 5
        %v911 = vand.u32 %v909, 31
        %v912 = vsub.s32 32, %v911
        %v913 = vshrl.u32 683565275, %v912
        %v914 = vshll.u32 683565275, %v911
        %v915 = vshrl.u32 2475754826, %v912
        %v916 = vor.u32 %v914, %v915
        %v917 = vshll.u32 2475754826, %v911
        %v918 = vshrl.u32 2131351028, %v912
        %v919 = vor.u32 %v917, %v918
        %v920 = vshll.u32 2131351028, %v911
        %v921 = vshrl.u32 2102212464, %v912
        %v922 = vor.u32 %v920, %v921
        %v923 = vshll.u32 2102212464, %v911
        %v924 = vshrl.u32 920167782, %v912
        %v925 = vor.u32 %v923, %v924
        %v926 = vshll.u32 920167782, %v911
        %v927 = vshrl.u32 1326507024, %v912
        %v928 = vor.u32 %v926, %v927
        %vm929 = vcmp.lt.s32.totalorder %v910, 1
        %vm930 = vcmp.lt.s32.totalorder %v910, 2
        %vm931 = vcmp.lt.s32.totalorder %v910, 3
        %vm932 = vcmp.lt.s32.totalorder %v910, 4
        %v933 = vsel %vm929, %v913, %v916
        %v934 = vsel %vm932, %v922, 2102212464
        %v935 = vsel %vm931, %v919, %v934
        %v936 = vsel %vm930, %v933, %v935
        %v937 = vsel %vm929, %v916, %v919
        %v938 = vsel %vm932, %v925, 920167782
        %v939 = vsel %vm931, %v922, %v938
        %v940 = vsel %vm930, %v937, %v939
        %v941 = vsel %vm929, %v919, %v922
        %v942 = vsel %vm932, %v928, 1326507024
        %v943 = vsel %vm931, %v925, %v942
        %v944 = vsel %vm930, %v941, %v943
        %v945 = vshll.u32 %v905, 8
        %v946 = vmul.u32.u64.compose %v945, %v944
        %v947 = vextract.low.u32 %v946
        %v948 = vextract.high.u32 %v946
        %v949 = vmul.u32.u64.compose %v945, %v940
        %v950 = vextract.low.u32 %v949
        %v951 = vextract.high.u32 %v949
        %v952 = vmul.u32 %v945, %v936
        %v953 = vadd.s32 %v948, %v950
        %vm954 = vc.u32 %v948, %v950
        %v955 = vadd.s32 %v951, 1
        %v956 = vsel %vm954, %v955, %v951
        %v957 = vadd.s32 %v952, %v956
        %v958 = vadd.s32 %v957, 536870912
        %v959 = vshrl.u32 %v958, 30
        %v960 = vshll.u32 %v959, 30
        %v961 = vsub.s32 %v957, %v960
        %vm962 = vcmp.lt.s32.totalorder %v961, 0
        %v963 = vsub.s32 0, %v961
        %v964 = vsel %vm962, %v963, %v961
        %v965 = vclz %v964
        %v966 = vsub.s32 %v965, 2
        %vm967 = vcmp.gt.s32.totalorder 0, %v966
        %v968 = vsel %vm967, 0, %v966
        %v969 = vsub.s32 32, %v968
        %v970 = vshll.u32 %v961, %v968
        %v971 = vshrl.u32 %v953, %v969
        %v972 = vor.u32 %v970, %v971
        %v973 = vsub.s32 4294967266, %v968
        %v974 = vadd.s32 %v973, 127
        %v975 = vshll.u32 %v974, 23
        %v976 = vor.u32 4788187, %v975
        %v977 = vand.u32 2147483647, %v976
        %v979 = vcvt.s32.f32 %v972
        %v980 = vmul.f32 %v979, %v977
        %v981 = vxor.u32 %v980, 2147483648
        %v982 = vsel %vm899, %v981, %v980
        %v983 = vsub.s32 4, %v959
        %v984 = vsel %vm899, %v983, %v959
        %v985 = vsel %vm898, %v264, %v982
        %v986 = vsel %vm898, 0, %v984
        %v987 = vcosq.f32.pop %v985
        %v988 = vsinq.f32.pop %v985
        %vm989 = vweird.f32 %v264
        %v990 = vadd.s32 %v986, 3
        %v991 = vand.u32 %v990, 3
        %vm992 = vcmp.lt.s32.totalorder %v991, 2
        %vm993 = vcmp.eq.s32.totalorder %v991, 0
        %v994 = vxor.u32 %v988, 2147483648
        %v995 = vsel %vm993, %v987, %v994
        %vm996 = vcmp.eq.s32.totalorder %v991, 2
        %v997 = vxor.u32 %v987, 2147483648
        %v998 = vsel %vm996, %v997, %v988
        %v999 = vsel %vm992, %v995, %v998
        %v1000 = vsel %vm989, nan, %v999
        %v1001 = vand.u32 2147483647, %v265
        %vm1002 = vcmp.le.f32.partialorder %v1001, 0.7853982
        %vm1003 = vcmp.lt.s32.totalorder %v265, 0
        %v1004 = vand.u32 %v265, 2139095040
        %v1005 = vshrl.u32 %v1004, 23
        %v1006 = vsub.s32 %v1005, 127
        %v1007 = vand.u32 2147483647, %v265
        %v1008 = vand.u32 %v1007, 8388607
        %v1009 = vor.u32 %v1008, 8388608
        %v1010 = vsub.s32 0, %v1009
        %v1011 = vadd.s32 %v1006, 1
        %vm1012 = vcmp.gt.s32.totalorder %v1011, 0
        %v1013 = vsel %vm1012, %v1011, 0
        %v1014 = vshrl.u32 %v1013, 5
        %v1015 = vand.u32 %v1013, 31
        %v1016 = vsub.s32 32, %v1015
        %v1017 = vshrl.u32 683565275, %v1016
        %v1018 = vshll.u32 683565275, %v1015
        %v1019 = vshrl.u32 2475754826, %v1016
        %v1020 = vor.u32 %v1018, %v1019
        %v1021 = vshll.u32 2475754826, %v1015
        %v1022 = vshrl.u32 2131351028, %v1016
        %v1023 = vor.u32 %v1021, %v1022
        %v1024 = vshll.u32 2131351028, %v1015
        %v1025 = vshrl.u32 2102212464, %v1016
        %v1026 = vor.u32 %v1024, %v1025
        %v1027 = vshll.u32 2102212464, %v1015
        %v1028 = vshrl.u32 920167782, %v1016
        %v1029 = vor.u32 %v1027, %v1028
        %v1030 = vshll.u32 920167782, %v1015
        %v1031 = vshrl.u32 1326507024, %v1016
        %v1032 = vor.u32 %v1030, %v1031
        %vm1033 = vcmp.lt.s32.totalorder %v1014, 1
        %vm1034 = vcmp.lt.s32.totalorder %v1014, 2
        %vm1035 = vcmp.lt.s32.totalorder %v1014, 3
        %vm1036 = vcmp.lt.s32.totalorder %v1014, 4
        %v1037 = vsel %vm1033, %v1017, %v1020
        %v1038 = vsel %vm1036, %v1026, 2102212464
        %v1039 = vsel %vm1035, %v1023, %v1038
        %v1040 = vsel %vm1034, %v1037, %v1039
        %v1041 = vsel %vm1033, %v1020, %v1023
        %v1042 = vsel %vm1036, %v1029, 920167782
        %v1043 = vsel %vm1035, %v1026, %v1042
        %v1044 = vsel %vm1034, %v1041, %v1043
        %v1045 = vsel %vm1033, %v1023, %v1026
        %v1046 = vsel %vm1036, %v1032, 1326507024
        %v1047 = vsel %vm1035, %v1029, %v1046
        %v1048 = vsel %vm1034, %v1045, %v1047
        %v1049 = vshll.u32 %v1009, 8
        %v1050 = vmul.u32.u64.compose %v1049, %v1048
        %v1051 = vextract.low.u32 %v1050
        %v1052 = vextract.high.u32 %v1050
        %v1053 = vmul.u32.u64.compose %v1049, %v1044
        %v1054 = vextract.low.u32 %v1053
        %v1055 = vextract.high.u32 %v1053
        %v1056 = vmul.u32 %v1049, %v1040
        %v1057 = vadd.s32 %v1052, %v1054
        %vm1058 = vc.u32 %v1052, %v1054
        %v1059 = vadd.s32 %v1055, 1
        %v1060 = vsel %vm1058, %v1059, %v1055
        %v1061 = vadd.s32 %v1056, %v1060
        %v1062 = vadd.s32 %v1061, 536870912
        %v1063 = vshrl.u32 %v1062, 30
        %v1064 = vshll.u32 %v1063, 30
        %v1065 = vsub.s32 %v1061, %v1064
        %vm1066 = vcmp.lt.s32.totalorder %v1065, 0
        %v1067 = vsub.s32 0, %v1065
        %v1068 = vsel %vm1066, %v1067, %v1065
        %v1069 = vclz %v1068
        %v1070 = vsub.s32 %v1069, 2
        %vm1071 = vcmp.gt.s32.totalorder 0, %v1070
        %v1072 = vsel %vm1071, 0, %v1070
        %v1073 = vsub.s32 32, %v1072
        %v1074 = vshll.u32 %v1065, %v1072
        %v1075 = vshrl.u32 %v1057, %v1073
        %v1076 = vor.u32 %v1074, %v1075
        %v1077 = vsub.s32 4294967266, %v1072
        %v1078 = vadd.s32 %v1077, 127
        %v1079 = vshll.u32 %v1078, 23
        %v1080 = vor.u32 4788187, %v1079
        %v1081 = vand.u32 2147483647, %v1080
        %v1083 = vcvt.s32.f32 %v1076
        %v1084 = vmul.f32 %v1083, %v1081
        %v1085 = vxor.u32 %v1084, 2147483648
        %v1086 = vsel %vm1003, %v1085, %v1084
        %v1087 = vsub.s32 4, %v1063
        %v1088 = vsel %vm1003, %v1087, %v1063
        %v1089 = vsel %vm1002, %v265, %v1086
        %v1090 = vsel %vm1002, 0, %v1088
        %v1091 = vcosq.f32.pop %v1089
        %v1092 = vsinq.f32.pop %v1089
        %vm1093 = vweird.f32 %v265
        %v1094 = vadd.s32 %v1090, 3
        %v1095 = vand.u32 %v1094, 3
        %vm1096 = vcmp.lt.s32.totalorder %v1095, 2
        %vm1097 = vcmp.eq.s32.totalorder %v1095, 0
        %v1098 = vxor.u32 %v1092, 2147483648
        %v1099 = vsel %vm1097, %v1091, %v1098
        %vm1100 = vcmp.eq.s32.totalorder %v1095, 2
        %v1101 = vxor.u32 %v1091, 2147483648
        %v1102 = vsel %vm1100, %v1101, %v1092
        %v1103 = vsel %vm1096, %v1099, %v1102
        %v1104 = vsel %vm1093, nan, %v1103
        %v1105 = vand.u32 2147483647, %v266
        %vm1106 = vcmp.le.f32.partialorder %v1105, 0.7853982
        %vm1107 = vcmp.lt.s32.totalorder %v266, 0
        %v1108 = vand.u32 %v266, 2139095040
        %v1109 = vshrl.u32 %v1108, 23
        %v1110 = vsub.s32 %v1109, 127
        %v1111 = vand.u32 2147483647, %v266
        %v1112 = vand.u32 %v1111, 8388607
        %v1113 = vor.u32 %v1112, 8388608
        %v1114 = vsub.s32 0, %v1113
        %v1115 = vadd.s32 %v1110, 1
        %vm1116 = vcmp.gt.s32.totalorder %v1115, 0
        %v1117 = vsel %vm1116, %v1115, 0
        %v1118 = vshrl.u32 %v1117, 5
        %v1119 = vand.u32 %v1117, 31
        %v1120 = vsub.s32 32, %v1119
        %v1121 = vshrl.u32 683565275, %v1120
        %v1122 = vshll.u32 683565275, %v1119
        %v1123 = vshrl.u32 2475754826, %v1120
        %v1124 = vor.u32 %v1122, %v1123
        %v1125 = vshll.u32 2475754826, %v1119
        %v1126 = vshrl.u32 2131351028, %v1120
        %v1127 = vor.u32 %v1125, %v1126
        %v1128 = vshll.u32 2131351028, %v1119
        %v1129 = vshrl.u32 2102212464, %v1120
        %v1130 = vor.u32 %v1128, %v1129
        %v1131 = vshll.u32 2102212464, %v1119
        %v1132 = vshrl.u32 920167782, %v1120
        %v1133 = vor.u32 %v1131, %v1132
        %v1134 = vshll.u32 920167782, %v1119
        %v1135 = vshrl.u32 1326507024, %v1120
        %v1136 = vor.u32 %v1134, %v1135
        %vm1137 = vcmp.lt.s32.totalorder %v1118, 1
        %vm1138 = vcmp.lt.s32.totalorder %v1118, 2
        %vm1139 = vcmp.lt.s32.totalorder %v1118, 3
        %vm1140 = vcmp.lt.s32.totalorder %v1118, 4
        %v1141 = vsel %vm1137, %v1121, %v1124
        %v1142 = vsel %vm1140, %v1130, 2102212464
        %v1143 = vsel %vm1139, %v1127, %v1142
        %v1144 = vsel %vm1138, %v1141, %v1143
        %v1145 = vsel %vm1137, %v1124, %v1127
        %v1146 = vsel %vm1140, %v1133, 920167782
        %v1147 = vsel %vm1139, %v1130, %v1146
        %v1148 = vsel %vm1138, %v1145, %v1147
        %v1149 = vsel %vm1137, %v1127, %v1130
        %v1150 = vsel %vm1140, %v1136, 1326507024
        %v1151 = vsel %vm1139, %v1133, %v1150
        %v1152 = vsel %vm1138, %v1149, %v1151
        %v1153 = vshll.u32 %v1113, 8
        %v1154 = vmul.u32.u64.compose %v1153, %v1152
        %v1155 = vextract.low.u32 %v1154
        %v1156 = vextract.high.u32 %v1154
        %v1157 = vmul.u32.u64.compose %v1153, %v1148
        %v1158 = vextract.low.u32 %v1157
        %v1159 = vextract.high.u32 %v1157
        %v1160 = vmul.u32 %v1153, %v1144
        %v1161 = vadd.s32 %v1156, %v1158
        %vm1162 = vc.u32 %v1156, %v1158
        %v1163 = vadd.s32 %v1159, 1
        %v1164 = vsel %vm1162, %v1163, %v1159
        %v1165 = vadd.s32 %v1160, %v1164
        %v1166 = vadd.s32 %v1165, 536870912
        %v1167 = vshrl.u32 %v1166, 30
        %v1168 = vshll.u32 %v1167, 30
        %v1169 = vsub.s32 %v1165, %v1168
        %vm1170 = vcmp.lt.s32.totalorder %v1169, 0
        %v1171 = vsub.s32 0, %v1169
        %v1172 = vsel %vm1170, %v1171, %v1169
        %v1173 = vclz %v1172
        %v1174 = vsub.s32 %v1173, 2
        %vm1175 = vcmp.gt.s32.totalorder 0, %v1174
        %v1176 = vsel %vm1175, 0, %v1174
        %v1177 = vsub.s32 32, %v1176
        %v1178 = vshll.u32 %v1169, %v1176
        %v1179 = vshrl.u32 %v1161, %v1177
        %v1180 = vor.u32 %v1178, %v1179
        %v1181 = vsub.s32 4294967266, %v1176
        %v1182 = vadd.s32 %v1181, 127
        %v1183 = vshll.u32 %v1182, 23
        %v1184 = vor.u32 4788187, %v1183
        %v1185 = vand.u32 2147483647, %v1184
        %v1187 = vcvt.s32.f32 %v1180
        %v1188 = vmul.f32 %v1187, %v1185
        %v1189 = vxor.u32 %v1188, 2147483648
        %v1190 = vsel %vm1107, %v1189, %v1188
        %v1191 = vsub.s32 4, %v1167
        %v1192 = vsel %vm1107, %v1191, %v1167
        %v1193 = vsel %vm1106, %v266, %v1190
        %v1194 = vsel %vm1106, 0, %v1192
        %v1195 = vcosq.f32.pop %v1193
        %v1196 = vsinq.f32.pop %v1193
        %vm1197 = vweird.f32 %v266
        %v1198 = vadd.s32 %v1194, 3
        %v1199 = vand.u32 %v1198, 3
        %vm1200 = vcmp.lt.s32.totalorder %v1199, 2
        %vm1201 = vcmp.eq.s32.totalorder %v1199, 0
        %v1202 = vxor.u32 %v1196, 2147483648
        %v1203 = vsel %vm1201, %v1195, %v1202
        %vm1204 = vcmp.eq.s32.totalorder %v1199, 2
        %v1205 = vxor.u32 %v1195, 2147483648
        %v1206 = vsel %vm1204, %v1205, %v1196
        %v1207 = vsel %vm1200, %v1203, %v1206
        %v1208 = vsel %vm1197, nan, %v1207
        %v1209 = vand.u32 2147483647, %v267
        %vm1210 = vcmp.le.f32.partialorder %v1209, 0.7853982
        %vm1211 = vcmp.lt.s32.totalorder %v267, 0
        %v1212 = vand.u32 %v267, 2139095040
        %v1213 = vshrl.u32 %v1212, 23
        %v1214 = vsub.s32 %v1213, 127
        %v1215 = vand.u32 2147483647, %v267
        %v1216 = vand.u32 %v1215, 8388607
        %v1217 = vor.u32 %v1216, 8388608
        %v1218 = vsub.s32 0, %v1217
        %v1219 = vadd.s32 %v1214, 1
        %vm1220 = vcmp.gt.s32.totalorder %v1219, 0
        %v1221 = vsel %vm1220, %v1219, 0
        %v1222 = vshrl.u32 %v1221, 5
        %v1223 = vand.u32 %v1221, 31
        %v1224 = vsub.s32 32, %v1223
        %v1225 = vshrl.u32 683565275, %v1224
        %v1226 = vshll.u32 683565275, %v1223
        %v1227 = vshrl.u32 2475754826, %v1224
        %v1228 = vor.u32 %v1226, %v1227
        %v1229 = vshll.u32 2475754826, %v1223
        %v1230 = vshrl.u32 2131351028, %v1224
        %v1231 = vor.u32 %v1229, %v1230
        %v1232 = vshll.u32 2131351028, %v1223
        %v1233 = vshrl.u32 2102212464, %v1224
        %v1234 = vor.u32 %v1232, %v1233
        %v1235 = vshll.u32 2102212464, %v1223
        %v1236 = vshrl.u32 920167782, %v1224
        %v1237 = vor.u32 %v1235, %v1236
        %v1238 = vshll.u32 920167782, %v1223
        %v1239 = vshrl.u32 1326507024, %v1224
        %v1240 = vor.u32 %v1238, %v1239
        %vm1241 = vcmp.lt.s32.totalorder %v1222, 1
        %vm1242 = vcmp.lt.s32.totalorder %v1222, 2
        %vm1243 = vcmp.lt.s32.totalorder %v1222, 3
        %vm1244 = vcmp.lt.s32.totalorder %v1222, 4
        %v1245 = vsel %vm1241, %v1225, %v1228
        %v1246 = vsel %vm1244, %v1234, 2102212464
        %v1247 = vsel %vm1243, %v1231, %v1246
        %v1248 = vsel %vm1242, %v1245, %v1247
        %v1249 = vsel %vm1241, %v1228, %v1231
        %v1250 = vsel %vm1244, %v1237, 920167782
        %v1251 = vsel %vm1243, %v1234, %v1250
        %v1252 = vsel %vm1242, %v1249, %v1251
        %v1253 = vsel %vm1241, %v1231, %v1234
        %v1254 = vsel %vm1244, %v1240, 1326507024
        %v1255 = vsel %vm1243, %v1237, %v1254
        %v1256 = vsel %vm1242, %v1253, %v1255
        %v1257 = vshll.u32 %v1217, 8
        %v1258 = vmul.u32.u64.compose %v1257, %v1256
        %v1259 = vextract.low.u32 %v1258
        %v1260 = vextract.high.u32 %v1258
        %v1261 = vmul.u32.u64.compose %v1257, %v1252
        %v1262 = vextract.low.u32 %v1261
        %v1263 = vextract.high.u32 %v1261
        %v1264 = vmul.u32 %v1257, %v1248
        %v1265 = vadd.s32 %v1260, %v1262
        %vm1266 = vc.u32 %v1260, %v1262
        %v1267 = vadd.s32 %v1263, 1
        %v1268 = vsel %vm1266, %v1267, %v1263
        %v1269 = vadd.s32 %v1264, %v1268
        %v1270 = vadd.s32 %v1269, 536870912
        %v1271 = vshrl.u32 %v1270, 30
        %v1272 = vshll.u32 %v1271, 30
        %v1273 = vsub.s32 %v1269, %v1272
        %vm1274 = vcmp.lt.s32.totalorder %v1273, 0
        %v1275 = vsub.s32 0, %v1273
        %v1276 = vsel %vm1274, %v1275, %v1273
        %v1277 = vclz %v1276
        %v1278 = vsub.s32 %v1277, 2
        %vm1279 = vcmp.gt.s32.totalorder 0, %v1278
        %v1280 = vsel %vm1279, 0, %v1278
        %v1281 = vsub.s32 32, %v1280
        %v1282 = vshll.u32 %v1273, %v1280
        %v1283 = vshrl.u32 %v1265, %v1281
        %v1284 = vor.u32 %v1282, %v1283
        %v1285 = vsub.s32 4294967266, %v1280
        %v1286 = vadd.s32 %v1285, 127
        %v1287 = vshll.u32 %v1286, 23
        %v1288 = vor.u32 4788187, %v1287
        %v1289 = vand.u32 2147483647, %v1288
        %v1291 = vcvt.s32.f32 %v1284
        %v1292 = vmul.f32 %v1291, %v1289
        %v1293 = vxor.u32 %v1292, 2147483648
        %v1294 = vsel %vm1211, %v1293, %v1292
        %v1295 = vsub.s32 4, %v1271
        %v1296 = vsel %vm1211, %v1295, %v1271
        %v1297 = vsel %vm1210, %v267, %v1294
        %v1298 = vsel %vm1210, 0, %v1296
        %v1299 = vcosq.f32.pop %v1297
        %v1300 = vsinq.f32.pop %v1297
        %vm1301 = vweird.f32 %v267
        %v1302 = vadd.s32 %v1298, 3
        %v1303 = vand.u32 %v1302, 3
        %vm1304 = vcmp.lt.s32.totalorder %v1303, 2
        %vm1305 = vcmp.eq.s32.totalorder %v1303, 0
        %v1306 = vxor.u32 %v1300, 2147483648
        %v1307 = vsel %vm1305, %v1299, %v1306
        %vm1308 = vcmp.eq.s32.totalorder %v1303, 2
        %v1309 = vxor.u32 %v1299, 2147483648
        %v1310 = vsel %vm1308, %v1309, %v1300
        %v1311 = vsel %vm1304, %v1307, %v1310
        %v1312 = vsel %vm1301, nan, %v1311
        %v1313 = vand.u32 2147483647, %v268
        %vm1314 = vcmp.le.f32.partialorder %v1313, 0.7853982
        %vm1315 = vcmp.lt.s32.totalorder %v268, 0
        %v1316 = vand.u32 %v268, 2139095040
        %v1317 = vshrl.u32 %v1316, 23
        %v1318 = vsub.s32 %v1317, 127
        %v1319 = vand.u32 2147483647, %v268
        %v1320 = vand.u32 %v1319, 8388607
        %v1321 = vor.u32 %v1320, 8388608
        %v1322 = vsub.s32 0, %v1321
        %v1323 = vadd.s32 %v1318, 1
        %vm1324 = vcmp.gt.s32.totalorder %v1323, 0
        %v1325 = vsel %vm1324, %v1323, 0
        %v1326 = vshrl.u32 %v1325, 5
        %v1327 = vand.u32 %v1325, 31
        %v1328 = vsub.s32 32, %v1327
        %v1329 = vshrl.u32 683565275, %v1328
        %v1330 = vshll.u32 683565275, %v1327
        %v1331 = vshrl.u32 2475754826, %v1328
        %v1332 = vor.u32 %v1330, %v1331
        %v1333 = vshll.u32 2475754826, %v1327
        %v1334 = vshrl.u32 2131351028, %v1328
        %v1335 = vor.u32 %v1333, %v1334
        %v1336 = vshll.u32 2131351028, %v1327
        %v1337 = vshrl.u32 2102212464, %v1328
        %v1338 = vor.u32 %v1336, %v1337
        %v1339 = vshll.u32 2102212464, %v1327
        %v1340 = vshrl.u32 920167782, %v1328
        %v1341 = vor.u32 %v1339, %v1340
        %v1342 = vshll.u32 920167782, %v1327
        %v1343 = vshrl.u32 1326507024, %v1328
        %v1344 = vor.u32 %v1342, %v1343
        %vm1345 = vcmp.lt.s32.totalorder %v1326, 1
        %vm1346 = vcmp.lt.s32.totalorder %v1326, 2
        %vm1347 = vcmp.lt.s32.totalorder %v1326, 3
        %vm1348 = vcmp.lt.s32.totalorder %v1326, 4
        %v1349 = vsel %vm1345, %v1329, %v1332
        %v1350 = vsel %vm1348, %v1338, 2102212464
        %v1351 = vsel %vm1347, %v1335, %v1350
        %v1352 = vsel %vm1346, %v1349, %v1351
        %v1353 = vsel %vm1345, %v1332, %v1335
        %v1354 = vsel %vm1348, %v1341, 920167782
        %v1355 = vsel %vm1347, %v1338, %v1354
        %v1356 = vsel %vm1346, %v1353, %v1355
        %v1357 = vsel %vm1345, %v1335, %v1338
        %v1358 = vsel %vm1348, %v1344, 1326507024
        %v1359 = vsel %vm1347, %v1341, %v1358
        %v1360 = vsel %vm1346, %v1357, %v1359
        %v1361 = vshll.u32 %v1321, 8
        %v1362 = vmul.u32.u64.compose %v1361, %v1360
        %v1363 = vextract.low.u32 %v1362
        %v1364 = vextract.high.u32 %v1362
        %v1365 = vmul.u32.u64.compose %v1361, %v1356
        %v1366 = vextract.low.u32 %v1365
        %v1367 = vextract.high.u32 %v1365
        %v1368 = vmul.u32 %v1361, %v1352
        %v1369 = vadd.s32 %v1364, %v1366
        %vm1370 = vc.u32 %v1364, %v1366
        %v1371 = vadd.s32 %v1367, 1
        %v1372 = vsel %vm1370, %v1371, %v1367
        %v1373 = vadd.s32 %v1368, %v1372
        %v1374 = vadd.s32 %v1373, 536870912
        %v1375 = vshrl.u32 %v1374, 30
        %v1376 = vshll.u32 %v1375, 30
        %v1377 = vsub.s32 %v1373, %v1376
        %vm1378 = vcmp.lt.s32.totalorder %v1377, 0
        %v1379 = vsub.s32 0, %v1377
        %v1380 = vsel %vm1378, %v1379, %v1377
        %v1381 = vclz %v1380
        %v1382 = vsub.s32 %v1381, 2
        %vm1383 = vcmp.gt.s32.totalorder 0, %v1382
        %v1384 = vsel %vm1383, 0, %v1382
        %v1385 = vsub.s32 32, %v1384
        %v1386 = vshll.u32 %v1377, %v1384
        %v1387 = vshrl.u32 %v1369, %v1385
        %v1388 = vor.u32 %v1386, %v1387
        %v1389 = vsub.s32 4294967266, %v1384
        %v1390 = vadd.s32 %v1389, 127
        %v1391 = vshll.u32 %v1390, 23
        %v1392 = vor.u32 4788187, %v1391
        %v1393 = vand.u32 2147483647, %v1392
        %v1395 = vcvt.s32.f32 %v1388
        %v1396 = vmul.f32 %v1395, %v1393
        %v1397 = vxor.u32 %v1396, 2147483648
        %v1398 = vsel %vm1315, %v1397, %v1396
        %v1399 = vsub.s32 4, %v1375
        %v1400 = vsel %vm1315, %v1399, %v1375
        %v1401 = vsel %vm1314, %v268, %v1398
        %v1402 = vsel %vm1314, 0, %v1400
        %v1403 = vcosq.f32.pop %v1401
        %v1404 = vsinq.f32.pop %v1401
        %vm1405 = vweird.f32 %v268
        %v1406 = vadd.s32 %v1402, 3
        %v1407 = vand.u32 %v1406, 3
        %vm1408 = vcmp.lt.s32.totalorder %v1407, 2
        %vm1409 = vcmp.eq.s32.totalorder %v1407, 0
        %v1410 = vxor.u32 %v1404, 2147483648
        %v1411 = vsel %vm1409, %v1403, %v1410
        %vm1412 = vcmp.eq.s32.totalorder %v1407, 2
        %v1413 = vxor.u32 %v1403, 2147483648
        %v1414 = vsel %vm1412, %v1413, %v1404
        %v1415 = vsel %vm1408, %v1411, %v1414
        %v1416 = vsel %vm1405, nan, %v1415
        %v1417 = vand.u32 2147483647, %v269
        %vm1418 = vcmp.le.f32.partialorder %v1417, 0.7853982
        %vm1419 = vcmp.lt.s32.totalorder %v269, 0
        %v1420 = vand.u32 %v269, 2139095040
        %v1421 = vshrl.u32 %v1420, 23
        %v1422 = vsub.s32 %v1421, 127
        %v1423 = vand.u32 2147483647, %v269
        %v1424 = vand.u32 %v1423, 8388607
        %v1425 = vor.u32 %v1424, 8388608
        %v1426 = vsub.s32 0, %v1425
        %v1427 = vadd.s32 %v1422, 1
        %vm1428 = vcmp.gt.s32.totalorder %v1427, 0
        %v1429 = vsel %vm1428, %v1427, 0
        %v1430 = vshrl.u32 %v1429, 5
        %v1431 = vand.u32 %v1429, 31
        %v1432 = vsub.s32 32, %v1431
        %v1433 = vshrl.u32 683565275, %v1432
        %v1434 = vshll.u32 683565275, %v1431
        %v1435 = vshrl.u32 2475754826, %v1432
        %v1436 = vor.u32 %v1434, %v1435
        %v1437 = vshll.u32 2475754826, %v1431
        %v1438 = vshrl.u32 2131351028, %v1432
        %v1439 = vor.u32 %v1437, %v1438
        %v1440 = vshll.u32 2131351028, %v1431
        %v1441 = vshrl.u32 2102212464, %v1432
        %v1442 = vor.u32 %v1440, %v1441
        %v1443 = vshll.u32 2102212464, %v1431
        %v1444 = vshrl.u32 920167782, %v1432
        %v1445 = vor.u32 %v1443, %v1444
        %v1446 = vshll.u32 920167782, %v1431
        %v1447 = vshrl.u32 1326507024, %v1432
        %v1448 = vor.u32 %v1446, %v1447
        %vm1449 = vcmp.lt.s32.totalorder %v1430, 1
        %vm1450 = vcmp.lt.s32.totalorder %v1430, 2
        %vm1451 = vcmp.lt.s32.totalorder %v1430, 3
        %vm1452 = vcmp.lt.s32.totalorder %v1430, 4
        %v1453 = vsel %vm1449, %v1433, %v1436
        %v1454 = vsel %vm1452, %v1442, 2102212464
        %v1455 = vsel %vm1451, %v1439, %v1454
        %v1456 = vsel %vm1450, %v1453, %v1455
        %v1457 = vsel %vm1449, %v1436, %v1439
        %v1458 = vsel %vm1452, %v1445, 920167782
        %v1459 = vsel %vm1451, %v1442, %v1458
        %v1460 = vsel %vm1450, %v1457, %v1459
        %v1461 = vsel %vm1449, %v1439, %v1442
        %v1462 = vsel %vm1452, %v1448, 1326507024
        %v1463 = vsel %vm1451, %v1445, %v1462
        %v1464 = vsel %vm1450, %v1461, %v1463
        %v1465 = vshll.u32 %v1425, 8
        %v1466 = vmul.u32.u64.compose %v1465, %v1464
        %v1467 = vextract.low.u32 %v1466
        %v1468 = vextract.high.u32 %v1466
        %v1469 = vmul.u32.u64.compose %v1465, %v1460
        %v1470 = vextract.low.u32 %v1469
        %v1471 = vextract.high.u32 %v1469
        %v1472 = vmul.u32 %v1465, %v1456
        %v1473 = vadd.s32 %v1468, %v1470
        %vm1474 = vc.u32 %v1468, %v1470
        %v1475 = vadd.s32 %v1471, 1
        %v1476 = vsel %vm1474, %v1475, %v1471
        %v1477 = vadd.s32 %v1472, %v1476
        %v1478 = vadd.s32 %v1477, 536870912
        %v1479 = vshrl.u32 %v1478, 30
        %v1480 = vshll.u32 %v1479, 30
        %v1481 = vsub.s32 %v1477, %v1480
        %vm1482 = vcmp.lt.s32.totalorder %v1481, 0
        %v1483 = vsub.s32 0, %v1481
        %v1484 = vsel %vm1482, %v1483, %v1481
        %v1485 = vclz %v1484
        %v1486 = vsub.s32 %v1485, 2
        %vm1487 = vcmp.gt.s32.totalorder 0, %v1486
        %v1488 = vsel %vm1487, 0, %v1486
        %v1489 = vsub.s32 32, %v1488
        %v1490 = vshll.u32 %v1481, %v1488
        %v1491 = vshrl.u32 %v1473, %v1489
        %v1492 = vor.u32 %v1490, %v1491
        %v1493 = vsub.s32 4294967266, %v1488
        %v1494 = vadd.s32 %v1493, 127
        %v1495 = vshll.u32 %v1494, 23
        %v1496 = vor.u32 4788187, %v1495
        %v1497 = vand.u32 2147483647, %v1496
        %v1499 = vcvt.s32.f32 %v1492
        %v1500 = vmul.f32 %v1499, %v1497
        %v1501 = vxor.u32 %v1500, 2147483648
        %v1502 = vsel %vm1419, %v1501, %v1500
        %v1503 = vsub.s32 4, %v1479
        %v1504 = vsel %vm1419, %v1503, %v1479
        %v1505 = vsel %vm1418, %v269, %v1502
        %v1506 = vsel %vm1418, 0, %v1504
        %v1507 = vcosq.f32.pop %v1505
        %v1508 = vsinq.f32.pop %v1505
        %vm1509 = vweird.f32 %v269
        %v1510 = vadd.s32 %v1506, 3
        %v1511 = vand.u32 %v1510, 3
        %vm1512 = vcmp.lt.s32.totalorder %v1511, 2
        %vm1513 = vcmp.eq.s32.totalorder %v1511, 0
        %v1514 = vxor.u32 %v1508, 2147483648
        %v1515 = vsel %vm1513, %v1507, %v1514
        %vm1516 = vcmp.eq.s32.totalorder %v1511, 2
        %v1517 = vxor.u32 %v1507, 2147483648
        %v1518 = vsel %vm1516, %v1517, %v1508
        %v1519 = vsel %vm1512, %v1515, %v1518
        %v1520 = vsel %vm1509, nan, %v1519
        %v1521 = vand.u32 2147483647, %v270
        %vm1522 = vcmp.le.f32.partialorder %v1521, 0.7853982
        %vm1523 = vcmp.lt.s32.totalorder %v270, 0
        %v1524 = vand.u32 %v270, 2139095040
        %v1525 = vshrl.u32 %v1524, 23
        %v1526 = vsub.s32 %v1525, 127
        %v1527 = vand.u32 2147483647, %v270
        %v1528 = vand.u32 %v1527, 8388607
        %v1529 = vor.u32 %v1528, 8388608
        %v1530 = vsub.s32 0, %v1529
        %v1531 = vadd.s32 %v1526, 1
        %vm1532 = vcmp.gt.s32.totalorder %v1531, 0
        %v1533 = vsel %vm1532, %v1531, 0
        %v1534 = vshrl.u32 %v1533, 5
        %v1535 = vand.u32 %v1533, 31
        %v1536 = vsub.s32 32, %v1535
        %v1537 = vshrl.u32 683565275, %v1536
        %v1538 = vshll.u32 683565275, %v1535
        %v1539 = vshrl.u32 2475754826, %v1536
        %v1540 = vor.u32 %v1538, %v1539
        %v1541 = vshll.u32 2475754826, %v1535
        %v1542 = vshrl.u32 2131351028, %v1536
        %v1543 = vor.u32 %v1541, %v1542
        %v1544 = vshll.u32 2131351028, %v1535
        %v1545 = vshrl.u32 2102212464, %v1536
        %v1546 = vor.u32 %v1544, %v1545
        %v1547 = vshll.u32 2102212464, %v1535
        %v1548 = vshrl.u32 920167782, %v1536
        %v1549 = vor.u32 %v1547, %v1548
        %v1550 = vshll.u32 920167782, %v1535
        %v1551 = vshrl.u32 1326507024, %v1536
        %v1552 = vor.u32 %v1550, %v1551
        %vm1553 = vcmp.lt.s32.totalorder %v1534, 1
        %vm1554 = vcmp.lt.s32.totalorder %v1534, 2
        %vm1555 = vcmp.lt.s32.totalorder %v1534, 3
        %vm1556 = vcmp.lt.s32.totalorder %v1534, 4
        %v1557 = vsel %vm1553, %v1537, %v1540
        %v1558 = vsel %vm1556, %v1546, 2102212464
        %v1559 = vsel %vm1555, %v1543, %v1558
        %v1560 = vsel %vm1554, %v1557, %v1559
        %v1561 = vsel %vm1553, %v1540, %v1543
        %v1562 = vsel %vm1556, %v1549, 920167782
        %v1563 = vsel %vm1555, %v1546, %v1562
        %v1564 = vsel %vm1554, %v1561, %v1563
        %v1565 = vsel %vm1553, %v1543, %v1546
        %v1566 = vsel %vm1556, %v1552, 1326507024
        %v1567 = vsel %vm1555, %v1549, %v1566
        %v1568 = vsel %vm1554, %v1565, %v1567
        %v1569 = vshll.u32 %v1529, 8
        %v1570 = vmul.u32.u64.compose %v1569, %v1568
        %v1571 = vextract.low.u32 %v1570
        %v1572 = vextract.high.u32 %v1570
        %v1573 = vmul.u32.u64.compose %v1569, %v1564
        %v1574 = vextract.low.u32 %v1573
        %v1575 = vextract.high.u32 %v1573
        %v1576 = vmul.u32 %v1569, %v1560
        %v1577 = vadd.s32 %v1572, %v1574
        %vm1578 = vc.u32 %v1572, %v1574
        %v1579 = vadd.s32 %v1575, 1
        %v1580 = vsel %vm1578, %v1579, %v1575
        %v1581 = vadd.s32 %v1576, %v1580
        %v1582 = vadd.s32 %v1581, 536870912
        %v1583 = vshrl.u32 %v1582, 30
        %v1584 = vshll.u32 %v1583, 30
        %v1585 = vsub.s32 %v1581, %v1584
        %vm1586 = vcmp.lt.s32.totalorder %v1585, 0
        %v1587 = vsub.s32 0, %v1585
        %v1588 = vsel %vm1586, %v1587, %v1585
        %v1589 = vclz %v1588
        %v1590 = vsub.s32 %v1589, 2
        %vm1591 = vcmp.gt.s32.totalorder 0, %v1590
        %v1592 = vsel %vm1591, 0, %v1590
        %v1593 = vsub.s32 32, %v1592
        %v1594 = vshll.u32 %v1585, %v1592
        %v1595 = vshrl.u32 %v1577, %v1593
        %v1596 = vor.u32 %v1594, %v1595
        %v1597 = vsub.s32 4294967266, %v1592
        %v1598 = vadd.s32 %v1597, 127
        %v1599 = vshll.u32 %v1598, 23
        %v1600 = vor.u32 4788187, %v1599
        %v1601 = vand.u32 2147483647, %v1600
        %v1603 = vcvt.s32.f32 %v1596
        %v1604 = vmul.f32 %v1603, %v1601
        %v1605 = vxor.u32 %v1604, 2147483648
        %v1606 = vsel %vm1523, %v1605, %v1604
        %v1607 = vsub.s32 4, %v1583
        %v1608 = vsel %vm1523, %v1607, %v1583
        %v1609 = vsel %vm1522, %v270, %v1606
        %v1610 = vsel %vm1522, 0, %v1608
        %v1611 = vcosq.f32.pop %v1609
        %v1612 = vsinq.f32.pop %v1609
        %vm1613 = vweird.f32 %v270
        %v1614 = vadd.s32 %v1610, 3
        %v1615 = vand.u32 %v1614, 3
        %vm1616 = vcmp.lt.s32.totalorder %v1615, 2
        %vm1617 = vcmp.eq.s32.totalorder %v1615, 0
        %v1618 = vxor.u32 %v1612, 2147483648
        %v1619 = vsel %vm1617, %v1611, %v1618
        %vm1620 = vcmp.eq.s32.totalorder %v1615, 2
        %v1621 = vxor.u32 %v1611, 2147483648
        %v1622 = vsel %vm1620, %v1621, %v1612
        %v1623 = vsel %vm1616, %v1619, %v1622
        %v1624 = vsel %vm1613, nan, %v1623
        %v1625 = vand.u32 2147483647, %v271
        %vm1626 = vcmp.le.f32.partialorder %v1625, 0.7853982
        %vm1627 = vcmp.lt.s32.totalorder %v271, 0
        %v1628 = vand.u32 %v271, 2139095040
        %v1629 = vshrl.u32 %v1628, 23
        %v1630 = vsub.s32 %v1629, 127
        %v1631 = vand.u32 2147483647, %v271
        %v1632 = vand.u32 %v1631, 8388607
        %v1633 = vor.u32 %v1632, 8388608
        %v1634 = vsub.s32 0, %v1633
        %v1635 = vadd.s32 %v1630, 1
        %vm1636 = vcmp.gt.s32.totalorder %v1635, 0
        %v1637 = vsel %vm1636, %v1635, 0
        %v1638 = vshrl.u32 %v1637, 5
        %v1639 = vand.u32 %v1637, 31
        %v1640 = vsub.s32 32, %v1639
        %v1641 = vshrl.u32 683565275, %v1640
        %v1642 = vshll.u32 683565275, %v1639
        %v1643 = vshrl.u32 2475754826, %v1640
        %v1644 = vor.u32 %v1642, %v1643
        %v1645 = vshll.u32 2475754826, %v1639
        %v1646 = vshrl.u32 2131351028, %v1640
        %v1647 = vor.u32 %v1645, %v1646
        %v1648 = vshll.u32 2131351028, %v1639
        %v1649 = vshrl.u32 2102212464, %v1640
        %v1650 = vor.u32 %v1648, %v1649
        %v1651 = vshll.u32 2102212464, %v1639
        %v1652 = vshrl.u32 920167782, %v1640
        %v1653 = vor.u32 %v1651, %v1652
        %v1654 = vshll.u32 920167782, %v1639
        %v1655 = vshrl.u32 1326507024, %v1640
        %v1656 = vor.u32 %v1654, %v1655
        %vm1657 = vcmp.lt.s32.totalorder %v1638, 1
        %vm1658 = vcmp.lt.s32.totalorder %v1638, 2
        %vm1659 = vcmp.lt.s32.totalorder %v1638, 3
        %vm1660 = vcmp.lt.s32.totalorder %v1638, 4
        %v1661 = vsel %vm1657, %v1641, %v1644
        %v1662 = vsel %vm1660, %v1650, 2102212464
        %v1663 = vsel %vm1659, %v1647, %v1662
        %v1664 = vsel %vm1658, %v1661, %v1663
        %v1665 = vsel %vm1657, %v1644, %v1647
        %v1666 = vsel %vm1660, %v1653, 920167782
        %v1667 = vsel %vm1659, %v1650, %v1666
        %v1668 = vsel %vm1658, %v1665, %v1667
        %v1669 = vsel %vm1657, %v1647, %v1650
        %v1670 = vsel %vm1660, %v1656, 1326507024
        %v1671 = vsel %vm1659, %v1653, %v1670
        %v1672 = vsel %vm1658, %v1669, %v1671
        %v1673 = vshll.u32 %v1633, 8
        %v1674 = vmul.u32.u64.compose %v1673, %v1672
        %v1675 = vextract.low.u32 %v1674
        %v1676 = vextract.high.u32 %v1674
        %v1677 = vmul.u32.u64.compose %v1673, %v1668
        %v1678 = vextract.low.u32 %v1677
        %v1679 = vextract.high.u32 %v1677
        %v1680 = vmul.u32 %v1673, %v1664
        %v1681 = vadd.s32 %v1676, %v1678
        %vm1682 = vc.u32 %v1676, %v1678
        %v1683 = vadd.s32 %v1679, 1
        %v1684 = vsel %vm1682, %v1683, %v1679
        %v1685 = vadd.s32 %v1680, %v1684
        %v1686 = vadd.s32 %v1685, 536870912
        %v1687 = vshrl.u32 %v1686, 30
        %v1688 = vshll.u32 %v1687, 30
        %v1689 = vsub.s32 %v1685, %v1688
        %vm1690 = vcmp.lt.s32.totalorder %v1689, 0
        %v1691 = vsub.s32 0, %v1689
        %v1692 = vsel %vm1690, %v1691, %v1689
        %v1693 = vclz %v1692
        %v1694 = vsub.s32 %v1693, 2
        %vm1695 = vcmp.gt.s32.totalorder 0, %v1694
        %v1696 = vsel %vm1695, 0, %v1694
        %v1697 = vsub.s32 32, %v1696
        %v1698 = vshll.u32 %v1689, %v1696
        %v1699 = vshrl.u32 %v1681, %v1697
        %v1700 = vor.u32 %v1698, %v1699
        %v1701 = vsub.s32 4294967266, %v1696
        %v1702 = vadd.s32 %v1701, 127
        %v1703 = vshll.u32 %v1702, 23
        %v1704 = vor.u32 4788187, %v1703
        %v1705 = vand.u32 2147483647, %v1704
        %v1707 = vcvt.s32.f32 %v1700
        %v1708 = vmul.f32 %v1707, %v1705
        %v1709 = vxor.u32 %v1708, 2147483648
        %v1710 = vsel %vm1627, %v1709, %v1708
        %v1711 = vsub.s32 4, %v1687
        %v1712 = vsel %vm1627, %v1711, %v1687
        %v1713 = vsel %vm1626, %v271, %v1710
        %v1714 = vsel %vm1626, 0, %v1712
        %v1715 = vcosq.f32.pop %v1713
        %v1716 = vsinq.f32.pop %v1713
        %vm1717 = vweird.f32 %v271
        %v1718 = vadd.s32 %v1714, 3
        %v1719 = vand.u32 %v1718, 3
        %vm1720 = vcmp.lt.s32.totalorder %v1719, 2
        %vm1721 = vcmp.eq.s32.totalorder %v1719, 0
        %v1722 = vxor.u32 %v1716, 2147483648
        %v1723 = vsel %vm1721, %v1715, %v1722
        %vm1724 = vcmp.eq.s32.totalorder %v1719, 2
        %v1725 = vxor.u32 %v1715, 2147483648
        %v1726 = vsel %vm1724, %v1725, %v1716
        %v1727 = vsel %vm1720, %v1723, %v1726
        %v1728 = vsel %vm1717, nan, %v1727
        %v1729 = vand.u32 2147483647, %v272
        %vm1730 = vcmp.le.f32.partialorder %v1729, 0.7853982
        %vm1731 = vcmp.lt.s32.totalorder %v272, 0
        %v1732 = vand.u32 %v272, 2139095040
        %v1733 = vshrl.u32 %v1732, 23
        %v1734 = vsub.s32 %v1733, 127
        %v1735 = vand.u32 2147483647, %v272
        %v1736 = vand.u32 %v1735, 8388607
        %v1737 = vor.u32 %v1736, 8388608
        %v1738 = vsub.s32 0, %v1737
        %v1739 = vadd.s32 %v1734, 1
        %vm1740 = vcmp.gt.s32.totalorder %v1739, 0
        %v1741 = vsel %vm1740, %v1739, 0
        %v1742 = vshrl.u32 %v1741, 5
        %v1743 = vand.u32 %v1741, 31
        %v1744 = vsub.s32 32, %v1743
        %v1745 = vshrl.u32 683565275, %v1744
        %v1746 = vshll.u32 683565275, %v1743
        %v1747 = vshrl.u32 2475754826, %v1744
        %v1748 = vor.u32 %v1746, %v1747
        %v1749 = vshll.u32 2475754826, %v1743
        %v1750 = vshrl.u32 2131351028, %v1744
        %v1751 = vor.u32 %v1749, %v1750
        %v1752 = vshll.u32 2131351028, %v1743
        %v1753 = vshrl.u32 2102212464, %v1744
        %v1754 = vor.u32 %v1752, %v1753
        %v1755 = vshll.u32 2102212464, %v1743
        %v1756 = vshrl.u32 920167782, %v1744
        %v1757 = vor.u32 %v1755, %v1756
        %v1758 = vshll.u32 920167782, %v1743
        %v1759 = vshrl.u32 1326507024, %v1744
        %v1760 = vor.u32 %v1758, %v1759
        %vm1761 = vcmp.lt.s32.totalorder %v1742, 1
        %vm1762 = vcmp.lt.s32.totalorder %v1742, 2
        %vm1763 = vcmp.lt.s32.totalorder %v1742, 3
        %vm1764 = vcmp.lt.s32.totalorder %v1742, 4
        %v1765 = vsel %vm1761, %v1745, %v1748
        %v1766 = vsel %vm1764, %v1754, 2102212464
        %v1767 = vsel %vm1763, %v1751, %v1766
        %v1768 = vsel %vm1762, %v1765, %v1767
        %v1769 = vsel %vm1761, %v1748, %v1751
        %v1770 = vsel %vm1764, %v1757, 920167782
        %v1771 = vsel %vm1763, %v1754, %v1770
        %v1772 = vsel %vm1762, %v1769, %v1771
        %v1773 = vsel %vm1761, %v1751, %v1754
        %v1774 = vsel %vm1764, %v1760, 1326507024
        %v1775 = vsel %vm1763, %v1757, %v1774
        %v1776 = vsel %vm1762, %v1773, %v1775
        %v1777 = vshll.u32 %v1737, 8
        %v1778 = vmul.u32.u64.compose %v1777, %v1776
        %v1779 = vextract.low.u32 %v1778
        %v1780 = vextract.high.u32 %v1778
        %v1781 = vmul.u32.u64.compose %v1777, %v1772
        %v1782 = vextract.low.u32 %v1781
        %v1783 = vextract.high.u32 %v1781
        %v1784 = vmul.u32 %v1777, %v1768
        %v1785 = vadd.s32 %v1780, %v1782
        %vm1786 = vc.u32 %v1780, %v1782
        %v1787 = vadd.s32 %v1783, 1
        %v1788 = vsel %vm1786, %v1787, %v1783
        %v1789 = vadd.s32 %v1784, %v1788
        %v1790 = vadd.s32 %v1789, 536870912
        %v1791 = vshrl.u32 %v1790, 30
        %v1792 = vshll.u32 %v1791, 30
        %v1793 = vsub.s32 %v1789, %v1792
        %vm1794 = vcmp.lt.s32.totalorder %v1793, 0
        %v1795 = vsub.s32 0, %v1793
        %v1796 = vsel %vm1794, %v1795, %v1793
        %v1797 = vclz %v1796
        %v1798 = vsub.s32 %v1797, 2
        %vm1799 = vcmp.gt.s32.totalorder 0, %v1798
        %v1800 = vsel %vm1799, 0, %v1798
        %v1801 = vsub.s32 32, %v1800
        %v1802 = vshll.u32 %v1793, %v1800
        %v1803 = vshrl.u32 %v1785, %v1801
        %v1804 = vor.u32 %v1802, %v1803
        %v1805 = vsub.s32 4294967266, %v1800
        %v1806 = vadd.s32 %v1805, 127
        %v1807 = vshll.u32 %v1806, 23
        %v1808 = vor.u32 4788187, %v1807
        %v1809 = vand.u32 2147483647, %v1808
        %v1811 = vcvt.s32.f32 %v1804
        %v1812 = vmul.f32 %v1811, %v1809
        %v1813 = vxor.u32 %v1812, 2147483648
        %v1814 = vsel %vm1731, %v1813, %v1812
        %v1815 = vsub.s32 4, %v1791
        %v1816 = vsel %vm1731, %v1815, %v1791
        %v1817 = vsel %vm1730, %v272, %v1814
        %v1818 = vsel %vm1730, 0, %v1816
        %v1819 = vcosq.f32.pop %v1817
        %v1820 = vsinq.f32.pop %v1817
        %vm1821 = vweird.f32 %v272
        %v1822 = vadd.s32 %v1818, 3
        %v1823 = vand.u32 %v1822, 3
        %vm1824 = vcmp.lt.s32.totalorder %v1823, 2
        %vm1825 = vcmp.eq.s32.totalorder %v1823, 0
        %v1826 = vxor.u32 %v1820, 2147483648
        %v1827 = vsel %vm1825, %v1819, %v1826
        %vm1828 = vcmp.eq.s32.totalorder %v1823, 2
        %v1829 = vxor.u32 %v1819, 2147483648
        %v1830 = vsel %vm1828, %v1829, %v1820
        %v1831 = vsel %vm1824, %v1827, %v1830
        %v1832 = vsel %vm1821, nan, %v1831
        %v1833 = vstv %s207
        %v1834 = vmul.f32 %v376, %v1833
        %v1835 = vmul.f32 %v480, %v1833
        %v1836 = vmul.f32 %v584, %v1833
        %v1837 = vmul.f32 %v688, %v1833
        %v1838 = vmul.f32 %v792, %v1833
        %v1839 = vmul.f32 %v896, %v1833
        %v1840 = vmul.f32 %v1000, %v1833
        %v1841 = vmul.f32 %v1104, %v1833
        %v1842 = vmul.f32 %v1208, %v1833
        %v1843 = vmul.f32 %v1312, %v1833
        %v1844 = vmul.f32 %v1416, %v1833
        %v1845 = vmul.f32 %v1520, %v1833
        %v1846 = vmul.f32 %v1624, %v1833
        %v1847 = vmul.f32 %v1728, %v1833
        %v1848 = vmul.f32 %v1832, %v1833
        %v1849 = vld [vmem:[%s174] sm:$0xff]
        %v1850 = vld [vmem:[%s174 + $0x8] sm:$0xff]
        %v1851 = vld [vmem:[%s174 + $0x10] sm:$0xff]
        %v1852 = vld [vmem:[%s174 + $0x18] sm:$0x3f]
        %v1868 = vcombine.low %v1834, %v1835
        %v1869 = vcombine.low %v1836, %v1837
        %v1871 = vunpack.c.l.s4 1983009808
        %v1872 = vunpack.c.0.s8 %v1871
        %v1873 = vlaneseq
        %v1874 = vshrl.u32 %v1873, 7
        %v1875 = vsub.s32 %v1872, %v1874
        %v1876 = vrot.slane %v1868, %v1875
        %v1878 = vunpack.c.l.s4 1983009808
        %v1879 = vunpack.c.0.s8 %v1878
        %v1880 = vlaneseq
        %v1881 = vshrl.u32 %v1880, 7
        %v1882 = vsub.s32 %v1879, %v1881
        %v1883 = vrot.slane %v1869, %v1882
        %v1884 = vcombine.low %v1876, %v1883
        %v1885 = vcombine.low %v1838, %v1839
        %v1886 = vcombine.low %v1840, %v1841
        %v1888 = vunpack.c.l.s4 1983009808
        %v1889 = vunpack.c.0.s8 %v1888
        %v1890 = vlaneseq
        %v1891 = vshrl.u32 %v1890, 7
        %v1892 = vsub.s32 %v1889, %v1891
        %v1893 = vrot.slane %v1885, %v1892
        %v1895 = vunpack.c.l.s4 1983009808
        %v1896 = vunpack.c.0.s8 %v1895
        %v1897 = vlaneseq
        %v1898 = vshrl.u32 %v1897, 7
        %v1899 = vsub.s32 %v1896, %v1898
        %v1900 = vrot.slane %v1886, %v1899
        %v1901 = vcombine.low %v1893, %v1900
        %v1902 = vcombine.low %v1842, %v1843
        %v1903 = vcombine.low %v1844, %v1845
        %v1905 = vunpack.c.l.s4 1983009808
        %v1906 = vunpack.c.0.s8 %v1905
        %v1907 = vlaneseq
        %v1908 = vshrl.u32 %v1907, 7
        %v1909 = vsub.s32 %v1906, %v1908
        %v1910 = vrot.slane %v1902, %v1909
        %v1912 = vunpack.c.l.s4 1983009808
        %v1913 = vunpack.c.0.s8 %v1912
        %v1914 = vlaneseq
        %v1915 = vshrl.u32 %v1914, 7
        %v1916 = vsub.s32 %v1913, %v1915
        %v1917 = vrot.slane %v1903, %v1916
        %v1918 = vcombine.low %v1910, %v1917
        %v1919 = vcombine.low %v1846, %v1847
        %v1921 = vunpack.c.l.s4 1983009808
        %v1922 = vunpack.c.0.s8 %v1921
        %v1923 = vlaneseq
        %v1924 = vshrl.u32 %v1923, 7
        %v1925 = vsub.s32 %v1922, %v1924
        %v1926 = vrot.slane %v1919, %v1925
        %v1928 = vunpack.c.l.s4 1983009808
        %v1929 = vunpack.c.0.s8 %v1928
        %v1930 = vlaneseq
        %v1931 = vshrl.u32 %v1930, 7
        %v1932 = vsub.s32 %v1929, %v1931
        %v1933 = vrot.slane %v1848, %v1932
        %v1934 = vcombine.low %v1926, %v1933
        %v1939 = vmul.f32 %v1849, %v1884
        %v1940 = vmul.f32 %v1850, %v1901
        %v1941 = vmul.f32 %v1851, %v1918
        %v1942 = vmul.f32 %v1852, %v1934
        %v1943 = vmax.f32 %v1939, -1.0
        %v1944 = vmax.f32 %v1940, -1.0
        %v1945 = vmax.f32 %v1941, -1.0
        %v1946 = vmax.f32 %v1942, -1.0
        %v1947 = vmin.f32 %v1943, 1.0
        %v1948 = vmin.f32 %v1944, 1.0
        %v1949 = vmin.f32 %v1945, 1.0
        %v1950 = vmin.f32 %v1946, 1.0
        %1951 = vst [vmem:[%s195] sm:$0xff] %v1947
        %1952 = vst [vmem:[%s195 + $0x8] sm:$0xff] %v1948
        %1953 = vst [vmem:[%s195 + $0x10] sm:$0xff] %v1949
        %1954 = vst [vmem:[%s195 + $0x18] sm:$0x3f] %v1950
        %s1955 = sand.u32 %s91, 1
        %s1956 = scalar_lea.sflag [#allocation4], %s1955
        %s1957 = sand.u32 %s91, 1
        %s1958 = smul.addr %s1957, 30
        %s1959 = scalar_lea.vmem [#allocation7], %s1958
        // Predicated region
        $region37: #{tpu_custom_call.1} parent=27 // pred_check
          %p1960 = pneg %p101
        $region38: #{tpu_custom_call.1} parent=27 // pred_check_branch
          %1962 = sbr.rel (%p1960) target = $region40
        $region39: #{tpu_custom_call.1} parent=27 // pred_region
          %s1963 = smul.u32 15, %s25
          %s1964 = ssub.s32 32, %s1963
          %p1965 = scmp.lt.s32.totalorder %s1964, 15
          %s1966 = scalar_select %p1965, %s1964, 15
          %s1967 = smul.u32 32, %s1966
          %s1969 = ssub.s32 480, %s1967
          %1970 = vsyncadd %s1956, %s1969
          %p1971 = scmp.ne.s32.totalorder 0, %s1967
          %s1972 = smul.addr %s24, 32
          %s1973 = sadd.s32 %s1963, %s1972
          %s1974 = smul.addr %s1973, 32
          %s1975 = scalar_lea.hbm %s2, %s1974
          %s1976 = smul.u32 %s1966, 2
          %s1977 = sshll.u32 %s1976, 4
          %s1978 = sshll.u32 %s1959, 4
          %s1979 = int_to_ptr.vmem [resolvable:$true] %s1978
          %1981 = dma.vmem_to_hbm [thread:$0]  (%p1971), %s1979, %s1977, %s1975, %s1956
        $region40: #{tpu_custom_call.1} parent=27 // pred_fallthru
          _
      $region28: #{tpu_custom_call.1} parent=5 // pred_fallthru
        _
      %p1982 = scmp.le.s32.totalorder 2, %s15
      // Predicated region
      $region41: #{tpu_custom_call.1} parent=5 // pred_check
        %p1983 = pneg %p1982
      $region42: #{tpu_custom_call.1} parent=5 // pred_check_branch
        %1985 = sbr.rel (%p1983) target = $region44
      $region43: #{tpu_custom_call.1} parent=5 // pred_region
        %s1986 = ssub.s32 %s15, 2
        // Predicated region
        $region45: #{tpu_custom_call.1} parent=43 // pred_check
          %p1987 = pneg %p107
        $region46: #{tpu_custom_call.1} parent=43 // pred_check_branch
          %1989 = sbr.rel (%p1987) target = $region48
        $region47: #{tpu_custom_call.1} parent=43 // pred_region
          %s1990 = sand.u32 %s92, 1
          %s1991 = scalar_lea.sflag [#allocation4], %s1990
          %s1992 = sand.u32 %s92, 1
          %s1993 = smul.addr %s1992, 30
          %s1994 = scalar_lea.vmem [#allocation7], %s1993
          %1995 = dma.done %s1991, 480
        $region48: #{tpu_custom_call.1} parent=43 // pred_fallthru
          _
      $region44: #{tpu_custom_call.1} parent=5 // pred_fallthru
        _
    $region6: #{tpu_custom_call.1} parent=1 // loop_footer
      %s19 = sadd.s32 1, %s15
    $region7: #{tpu_custom_call.1} parent=1 // loop_footer_branch
      %14 = sbr.rel target = $region3
    $region8: #{tpu_custom_call.1} parent=1 // loop_exit
      _
    %1996 = vsyncpa [#allocation3], 1
    %s1997 = scalar_lea.sflag [#allocation3], 1
    %1998 = vsyncpa %s1997, 1
    %1999 = vsyncpa [#allocation4], 1
    %s2000 = scalar_lea.sflag [#allocation4], 1
    %2001 = vsyncpa %s2000, 1
    %2002 = vsyncpa [#allocation5], 1
    %s2003 = scalar_lea.sflag [#allocation5], 1
    %2004 = vsyncpa %s2003, 1

</llo_original>
